<compile_context>
chip_gen: v7x
topology: tpu7x:2x2x1
jax: 0.10.0
libtpu: 0.0.40
codegen_flags: <defaults>
</compile_context>

<pallas_src>
import functools

import jax
import jax.numpy as jnp
from jax.experimental import pallas as pl
from jax.experimental.pallas import tpu as pltpu


def _premalconv_kernel(x_ref, w12_ref, b12_ref, wd1_ref, bd1_ref, wd2_ref,
                       bd2_ref, out_ref, acc_ref, *, n_valid_windows):
    """Grid = (batch blocks ["parallel"], window tiles ["arbitrary", last])."""
    j = pl.program_id(1)

    # Init the running-max accumulator on the first window tile of this block.
    @pl.when(j == 0)
    def _init():
        acc_ref[...] = jnp.full(acc_ref.shape, -jnp.inf, acc_ref.dtype)

    bb, t, k = x_ref.shape
    c = acc_ref.shape[-1]

    # Fused conv1||conv2 as one (M, K) x (K, 2C) MXU matmul, M = bb*t (>= 256).
    x2d = x_ref[...].reshape(bb * t, k)                                    # bf16
    conv = jnp.dot(x2d, w12_ref[...],
                   preferred_element_type=jnp.float32) + b12_ref[...]      # (M, 2C) f32
    conv1 = conv[:, :c]                                                    # relu branch
    conv2 = conv[:, c:]                                                    # gate branch

    # sigmoid(conv2) via exp(-x) and an EUP approx reciprocal (keeps the divide
    # off the VALU; clamp avoids exp overflow for very negative pre-activations).
    gate = pl.reciprocal(1.0 + jnp.exp(-jnp.maximum(conv2, -30.0)), approx=True)
    gated = jnp.maximum(conv1, 0.0) * gate                                 # (M, C) f32

    # Partial max-pool over this tile's windows; padded windows -> -inf so they
    # can never win the running max.
    gated3 = gated.reshape(bb, t, c)
    win_idx = j * t + jax.lax.broadcasted_iota(jnp.int32, (1, t, 1), 1)
    gated3 = jnp.where(win_idx < n_valid_windows, gated3, -jnp.inf)
    acc_ref[...] = jnp.maximum(acc_ref[...], jnp.max(gated3, axis=1))      # (BB, C)

    # Dense tail once, after the last window tile.  NOTE: correctness relies on
    # the window (reduction) axis being the LAST grid axis and the out block
    # index being constant in j — do not reorder the grid.
    @pl.when(j == pl.num_programs(1) - 1)
    def _finalize():
        pooled = acc_ref[...]                                              # (BB, C)
        h = jnp.dot(pooled, wd1_ref[...],
                    preferred_element_type=jnp.float32) + bd1_ref[...]     # (BB, H)
        h = jnp.maximum(h, 0.0)
        logit = jnp.dot(h, wd2_ref[...],
                        preferred_element_type=jnp.float32) + bd2_ref[...] # (BB, 1)
        out_ref[...] = jax.nn.sigmoid(logit).reshape(bb, 1, 1)


def _vmem_limit_bytes():
    """Generation-aware scoped VMEM limit: half the physical capacity, capped.
    v5e/v6e: 128 MiB physical -> 64 MiB scoped;  v7x: 64 MiB -> 32 MiB."""
    try:
        cap = int(pltpu.get_tpu_info().vmem_capacity_bytes)
    except Exception:
        cap = 64 << 20
    return int(min(cap // 2, 64 << 20))


def _pick_batch_block(B):
    """Keep the 'parallel' batch axis extent >= 2 when possible so v7x's two
    TensorCores both get work (no effect on single-TC v5e/v6e)."""
    if B >= 16 and B % 8 == 0:
        return 8
    if B >= 2 and B % 2 == 0:
        return B // 2
    # TODO(synk): for B == 1 (or odd B), split the window axis into a leading
    # "parallel" chunk emitting per-chunk partial maxima to occupy both v7x TCs.
    return B


def _pick_tile_nw(nW, BB, K, C, vmem_limit_bytes):
    """Window-axis tile: BB*tile_nw targets 512 MXU rows (>= 256) while the
    double-buffered bf16 x tile + f32 conv/gate temporaries stay inside ~1/3 of
    the scoped VMEM limit.  Tiles are balanced so padding waste stays small."""
    per_row = 2 * (2 * K) + 3 * (2 * C) * 4          # 2 bufs of bf16 x row + f32 temps
    budget = max(vmem_limit_bytes // 3, 2 << 20)
    cap_rows = max(16, budget // per_row)
    max_rows = min(cap_rows, 512)                     # M target
    max_tile = max(16, (max_rows // BB) // 16 * 16)   # multiple of 16 (bf16 packing)
    n_tiles = pl.cdiv(nW, max_tile)
    tile = pl.cdiv(pl.cdiv(nW, n_tiles), 16) * 16     # balanced, multiple of 16
    return int(tile)


def init_params(key, embed_dim=8, conv_out=128, window=64, hidden=128):
    """Deterministic synthetic parameters, shaped like the PyTorch module."""
    ks = jax.random.split(key, 9)
    emb = jax.random.normal(ks[0], (257, embed_dim), jnp.float32) * 0.1
    emb = emb.at[0].set(0.0)  # padding_idx=0 zeroes row 0 (as in nn.Embedding)
    return {
        "emb": emb,
        "w1": jax.random.normal(ks[1], (conv_out, embed_dim, window), jnp.float32) * 0.05,
        "b1": jax.random.normal(ks[2], (conv_out,), jnp.float32) * 0.05,
        "w2": jax.random.normal(ks[3], (conv_out, embed_dim, window), jnp.float32) * 0.05,
        "b2": jax.random.normal(ks[4], (conv_out,), jnp.float32) * 0.05,
        "wd1": jax.random.normal(ks[5], (hidden, conv_out), jnp.float32) * 0.05,  # (out,in)
        "bd1": jax.random.normal(ks[6], (hidden,), jnp.float32) * 0.05,
        "wd2": jax.random.normal(ks[7], (1, hidden), jnp.float32) * 0.05,          # (out,in)
        "bd2": jax.random.normal(ks[8], (1,), jnp.float32) * 0.05,
    }


def premalconv_forward(tokens, params, window, *, tile_nw=None, batch_block=None):
    """PreMalConv forward.  tokens: (B, L) int32 in [0, 257) -> (B, 1) f32."""
    B, L = tokens.shape
    E = params["emb"].shape[1]
    C = params["w1"].shape[0]
    H = params["wd1"].shape[0]
    assert L % window == 0, "sequence length must be a multiple of the window"
    nW = L // window
    K = window * E

    vmem_limit = _vmem_limit_bytes()
    BB = batch_block if batch_block is not None else _pick_batch_block(B)
    assert B % BB == 0
    if tile_nw is None:
        tile_nw = _pick_tile_nw(nW, BB, K, C, vmem_limit)
    n_tiles = pl.cdiv(nW, tile_nw)
    nW_pad = n_tiles * tile_nw

    # Glue: embedding gather in bf16 end-to-end (no f32 (B,L,E) intermediate in
    # HBM) + window flattening (flat index = k*E + c).  Padded windows use
    # token 0 and are masked to -inf inside the kernel.
    # TODO(synk): move the gather in-kernel (stream int32 tokens, keep the
    # 257xE table resident in VMEM) to cut streamed HBM bytes ~8x more.
    tok = tokens
    if nW_pad != nW:
        tok = jnp.pad(tok, ((0, 0), (0, (nW_pad - nW) * window)))
    emb_bf16 = params["emb"].astype(jnp.bfloat16)
    x = jnp.take(emb_bf16, tok, axis=0).reshape(B, nW_pad, K)     # (B, nW_pad, W*E) bf16

    # Conv weights (O, E, W) -> (W*E, O); fuse conv1||conv2 into one (K, 2C)
    # matrix so x is read from VMEM once per tile.  Dense weights to (in, out).
    w1 = jnp.transpose(params["w1"], (2, 1, 0)).reshape(K, C)
    w2 = jnp.transpose(params["w2"], (2, 1, 0)).reshape(K, C)
    w12 = jnp.concatenate([w1, w2], axis=1).astype(jnp.bfloat16)                   # (K, 2C)
    b12 = jnp.concatenate([params["b1"], params["b2"]]).reshape(1, 2 * C).astype(jnp.float32)
    wd1 = params["wd1"].T.astype(jnp.float32)                                      # (C, H)
    bd1 = params["bd1"].reshape(1, H).astype(jnp.float32)
    wd2 = params["wd2"].T.astype(jnp.float32)                                      # (H, 1)
    bd2 = params["bd2"].reshape(1, 1).astype(jnp.float32)

    grid = (B // BB, n_tiles)

    def fixed(shape):
        return pl.BlockSpec(shape, lambda b, j, _n=len(shape): (0,) * _n)

    cost = pl.CostEstimate(
        flops=2 * B * nW_pad * K * (2 * C) + 2 * B * C * H + 2 * B * H,
        transcendentals=B * nW_pad * C + B,
        bytes_accessed=(B * nW_pad * K * 2 + K * 2 * C * 2 + 2 * C * 4
                        + C * H * 4 + H * 4 + H * 4 + 4 + B * 4),
    )

    kernel = functools.partial(_premalconv_kernel, n_valid_windows=nW)

    out = pl.pallas_call(
        kernel,
        out_shape=jax.ShapeDtypeStruct((B, 1, 1), jnp.float32),
        grid_spec=pltpu.PrefetchScalarGridSpec(
            num_scalar_prefetch=0,
            grid=grid,
            in_specs=[
                pl.BlockSpec((BB, tile_nw, K), lambda b, j: (b, j, 0)),   # streamed x
                fixed((K, 2 * C)), fixed((1, 2 * C)),                     # fused conv w/b
                fixed((C, H)), fixed((1, H)),                             # dense_1
                fixed((H, 1)), fixed((1, 1)),                             # dense_2
            ],
            out_specs=pl.BlockSpec((BB, 1, 1), lambda b, j: (b, 0, 0)),
            scratch_shapes=[pltpu.VMEM((BB, C), jnp.float32)],            # running max
        ),
        compiler_params=pltpu.CompilerParams(
            dimension_semantics=("parallel", "arbitrary"),
            vmem_limit_bytes=vmem_limit),
        cost_estimate=cost,
    )(x, w12, b12, wd1, bd1, wd2, bd2)
    return out.reshape(B, 1)


def premalconv_reference(tokens, params, window):
    """Pure-JAX (f32) reference mirroring the PyTorch forward exactly."""
    B, L = tokens.shape
    nW = L // window
    emb = jnp.take(params["emb"], tokens, axis=0)                 # (B, L, E)
    xw = emb.reshape(B, nW, window, emb.shape[-1])                # (B, nW, W, E)
    conv1 = jnp.einsum("bjkc,ock->bjo", xw, params["w1"]) + params["b1"]
    conv2 = jnp.einsum("bjkc,ock->bjo", xw, params["w2"]) + params["b2"]
    gated = jnp.maximum(conv1, 0.0) * jax.nn.sigmoid(conv2)       # (B, nW, C)
    pooled = jnp.max(gated, axis=1)                               # (B, C)
    h = jnp.maximum(pooled @ params["wd1"].T + params["bd1"], 0.0)
    return jax.nn.sigmoid(h @ params["wd2"].T + params["bd2"])    # (B, 1)


if __name__ == "__main__":
    # Small-but-representative shapes: batch=2, window=64, nW=600 conv positions
    # (L=38400), embed_dim=8, conv channels=128, hidden=128.  Defaults give
    # BB=1 (parallel extent 2), tile_nw=304 -> grid (2, 2): exercises the
    # running-max accumulate across window tiles, the padded-window masking
    # (nW_pad=608), and an MXU M of 304 (>= 256).
    B, WINDOW, NW = 2, 64, 600
    L = WINDOW * NW
    key = jax.random.PRNGKey(0)
    k_tok, k_par = jax.random.split(key)

    tokens = jax.random.randint(k_tok, (B, L), 0, 257, dtype=jnp.int32)
    params = init_params(k_par, embed_dim=8, conv_out=128, window=WINDOW, hidden=128)

    out = premalconv_forward(tokens, params, WINDOW)
    out = jax.block_until_ready(out)

    ref = jax.block_until_ready(premalconv_reference(tokens, params, WINDOW))
    assert out.shape == (B, 1)
    # bf16 conv path + approx-reciprocal gate -> loosened tolerance vs f32 ref.
    assert jnp.allclose(out, ref, atol=5e-3, rtol=5e-3), (out, ref)

    print("KERNEL_OK")
</pallas_src>

<mosaic_0001>
module attributes {stable_mosaic.version = 11 : i64} {
  func.func @_premalconv_kernel(%arg0: i32, %arg1: i32, %arg2: memref<1x304x512xbf16, #tpu.memory_space<vmem>>, %arg3: memref<512x256xbf16, #tpu.memory_space<vmem>>, %arg4: memref<1x256xf32, #tpu.memory_space<vmem>>, %arg5: memref<128x128xf32, #tpu.memory_space<vmem>>, %arg6: memref<1x128xf32, #tpu.memory_space<vmem>>, %arg7: memref<128x1xf32, #tpu.memory_space<vmem>>, %arg8: memref<1x1xf32, #tpu.memory_space<vmem>>, %arg9: memref<1x1x1xf32, #tpu.memory_space<vmem>>, %arg10: memref<1x128xf32, #tpu.memory_space<vmem>>) attributes {dimension_semantics = [#tpu.dimension_semantics<parallel>, #tpu.dimension_semantics<arbitrary>], iteration_bounds = array<i64: 2, 2>, scalar_prefetch = 0 : i64, scratch_operands = 1 : i64, tpu.core_type = #tpu.core_type<tc>, window_params = [{transform_indices = @transform_0, window_bounds = array<i64: 1, 304, 512>}, {pipeline_mode = #tpu.pipeline_mode<synchronous>, transform_indices = @transform_1, window_bounds = array<i64: 512, 256>}, {pipeline_mode = #tpu.pipeline_mode<synchronous>, transform_indices = @transform_2, window_bounds = array<i64: 1, 256>}, {pipeline_mode = #tpu.pipeline_mode<synchronous>, transform_indices = @transform_3, window_bounds = array<i64: 128, 128>}, {pipeline_mode = #tpu.pipeline_mode<synchronous>, transform_indices = @transform_4, window_bounds = array<i64: 1, 128>}, {pipeline_mode = #tpu.pipeline_mode<synchronous>, transform_indices = @transform_5, window_bounds = array<i64: 128, 1>}, {pipeline_mode = #tpu.pipeline_mode<synchronous>, transform_indices = @transform_6, window_bounds = array<i64: 1, 1>}, {transform_indices = @transform_7, window_bounds = array<i64: 1, 1, 1>}]} {
    %c0_i32 = arith.constant 0 : i32
    %0 = arith.cmpi eq, %arg1, %c0_i32 : i32
    %1 = arith.extui %0 : i1 to i32
    %c0_i32_0 = arith.constant 0 : i32
    %2 = arith.cmpi ne, %1, %c0_i32_0 : i32
    scf.if %2 {
      %cst_18 = arith.constant 0xFF800000 : f32
      %41 = vector.broadcast %cst_18 : f32 to vector<1x128xf32>
      %c0_19 = arith.constant 0 : index
      %c0_20 = arith.constant 0 : index
      %42 = vector.load %arg10[%c0_19, %c0_20] : memref<1x128xf32, #tpu.memory_space<vmem>>, vector<1x128xf32>
      tpu.vector_store %arg10[%c0_19, %c0_20], %41 {strides = array<i32>} : memref<1x128xf32, #tpu.memory_space<vmem>>, vector<1x128xf32>,
    } else {
    }
    %c0 = arith.constant 0 : index
    %c0_1 = arith.constant 0 : index
    %c0_2 = arith.constant 0 : index
    %3 = vector.load %arg2[%c0, %c0_1, %c0_2] : memref<1x304x512xbf16, #tpu.memory_space<vmem>>, vector<1x304x512xbf16>
    %4 = vector.shape_cast %3 : vector<1x304x512xbf16> to vector<304x512xbf16>
    %c0_3 = arith.constant 0 : index
    %c0_4 = arith.constant 0 : index
    %5 = vector.load %arg3[%c0_3, %c0_4] : memref<512x256xbf16, #tpu.memory_space<vmem>>, vector<512x256xbf16>
    %cst = arith.constant dense<0.000000e+00> : vector<304x256xf32>
    %6 = tpu.matmul %4, %5, %cst {dimension_numbers = #tpu.dot_dimension_numbers<[1], [0], [0], [1], [0, 0, 1, 1], [], []>} : vector<304x512xbf16>, vector<512x256xbf16>, vector<304x256xf32> -> vector<304x256xf32>
    %c0_5 = arith.constant 0 : index
    %c0_6 = arith.constant 0 : index
    %7 = vector.load %arg4[%c0_5, %c0_6] : memref<1x256xf32, #tpu.memory_space<vmem>>, vector<1x256xf32>
    %8 = vector.broadcast %7 : vector<1x256xf32> to vector<304x256xf32>
    %9 = arith.addf %6, %8 : vector<304x256xf32>
    %10 = vector.extract_strided_slice %9 {offsets = [0, 0], sizes = [304, 128], strides = [1, 1]} : vector<304x256xf32> to vector<304x128xf32>
    %11 = vector.extract_strided_slice %9 {offsets = [0, 128], sizes = [304, 128], strides = [1, 1]} : vector<304x256xf32> to vector<304x128xf32>
    %cst_7 = arith.constant -3.000000e+01 : f32
    %12 = vector.broadcast %cst_7 : f32 to vector<304x128xf32>
    %13 = arith.maximumf %11, %12 : vector<304x128xf32>
    %cst_8 = arith.constant 0.000000e+00 : f32
    %14 = vector.broadcast %cst_8 : f32 to vector<304x128xf32>
    %15 = arith.subf %14, %13 : vector<304x128xf32>
    %16 = math.exp %15 : vector<304x128xf32>
    %cst_9 = arith.constant 1.000000e+00 : f32
    %17 = vector.broadcast %cst_9 : f32 to vector<304x128xf32>
    %18 = arith.addf %17, %16 : vector<304x128xf32>
    %19 = tpu.reciprocal %18 {approx = true} : vector<304x128xf32> -> vector<304x128xf32>
    %cst_10 = arith.constant 0.000000e+00 : f32
    %20 = vector.broadcast %cst_10 : f32 to vector<304x128xf32>
    %21 = arith.maximumf %10, %20 : vector<304x128xf32>
    %22 = arith.mulf %21, %19 : vector<304x128xf32>
    %23 = vector.shape_cast %22 : vector<304x128xf32> to vector<1x304x128xf32>
    %c304_i32 = arith.constant 304 : i32
    %24 = arith.muli %arg1, %c304_i32 : i32
    %25 = tpu.iota {dimensions = array<i32: 1>} : vector<1x304x1xi32>
    %26 = vector.broadcast %24 : i32 to vector<1x304x1xi32>
    %27 = arith.addi %26, %25 : vector<1x304x1xi32>
    %c600_i32 = arith.constant 600 : i32
    %28 = vector.broadcast %c600_i32 : i32 to vector<1x304x1xi32>
    %29 = arith.cmpi slt, %27, %28 : vector<1x304x1xi32>
    %cst_11 = arith.constant 0xFF800000 : f32
    %30 = vector.shape_cast %29 : vector<1x304x1xi1> to vector<1x304x1xi1>
    %31 = vector.broadcast %30 : vector<1x304x1xi1> to vector<1x304x128xi1>
    %32 = vector.broadcast %cst_11 : f32 to vector<1x304x128xf32>
    %33 = arith.select %31, %23, %32 : vector<1x304x128xi1>, vector<1x304x128xf32>
    %c0_12 = arith.constant 0 : index
    %c0_13 = arith.constant 0 : index
    %34 = vector.load %arg10[%c0_12, %c0_13] : memref<1x128xf32, #tpu.memory_space<vmem>>, vector<1x128xf32>
    %cst_14 = arith.constant dense<0xFF800000> : vector<1x128xf32>
    %35 = vector.multi_reduction <maximumf>, %33, %cst_14 [1] : vector<1x304x128xf32> to vector<1x128xf32>
    %36 = arith.maximumf %34, %35 : vector<1x128xf32>
    %c0_15 = arith.constant 0 : index
    %c0_16 = arith.constant 0 : index
    %37 = vector.load %arg10[%c0_15, %c0_16] : memref<1x128xf32, #tpu.memory_space<vmem>>, vector<1x128xf32>
    tpu.vector_store %arg10[%c0_15, %c0_16], %36 {strides = array<i32>} : memref<1x128xf32, #tpu.memory_space<vmem>>, vector<1x128xf32>,
    %c1_i32 = arith.constant 1 : i32
    %38 = arith.cmpi eq, %arg1, %c1_i32 : i32
    %39 = arith.extui %38 : i1 to i32
    %c0_i32_17 = arith.constant 0 : i32
    %40 = arith.cmpi ne, %39, %c0_i32_17 : i32
    scf.if %40 {
      %c0_18 = arith.constant 0 : index
      %c0_19 = arith.constant 0 : index
      %41 = vector.load %arg10[%c0_18, %c0_19] : memref<1x128xf32, #tpu.memory_space<vmem>>, vector<1x128xf32>
      %c0_20 = arith.constant 0 : index
      %c0_21 = arith.constant 0 : index
      %42 = vector.load %arg5[%c0_20, %c0_21] : memref<128x128xf32, #tpu.memory_space<vmem>>, vector<128x128xf32>
      %cst_22 = arith.constant dense<0.000000e+00> : vector<1x128xf32>
      %43 = tpu.matmul %41, %42, %cst_22 {dimension_numbers = #tpu.dot_dimension_numbers<[1], [0], [0], [1], [0, 0, 1, 1], [], []>} : vector<1x128xf32>, vector<128x128xf32>, vector<1x128xf32> -> vector<1x128xf32>
      %c0_23 = arith.constant 0 : index
      %c0_24 = arith.constant 0 : index
      %44 = vector.load %arg6[%c0_23, %c0_24] : memref<1x128xf32, #tpu.memory_space<vmem>>, vector<1x128xf32>
      %45 = arith.addf %43, %44 : vector<1x128xf32>
      %cst_25 = arith.constant 0.000000e+00 : f32
      %46 = vector.broadcast %cst_25 : f32 to vector<1x128xf32>
      %47 = arith.maximumf %45, %46 : vector<1x128xf32>
      %c0_26 = arith.constant 0 : index
      %c0_27 = arith.constant 0 : index
      %48 = vector.load %arg7[%c0_26, %c0_27] : memref<128x1xf32, #tpu.memory_space<vmem>>, vector<128x1xf32>
      %cst_28 = arith.constant dense<0.000000e+00> : vector<1x1xf32>
      %49 = tpu.matmul %47, %48, %cst_28 {dimension_numbers = #tpu.dot_dimension_numbers<[1], [0], [0], [1], [0, 0, 1, 1], [], []>} : vector<1x128xf32>, vector<128x1xf32>, vector<1x1xf32> -> vector<1x1xf32>
      %c0_29 = arith.constant 0 : index
      %c0_30 = arith.constant 0 : index
      %50 = vector.load %arg8[%c0_29, %c0_30] : memref<1x1xf32, #tpu.memory_space<vmem>>, vector<1x1xf32>
      %51 = arith.addf %49, %50 : vector<1x1xf32>
      %52 = arith.negf %51 : vector<1x1xf32>
      %53 = math.exp %52 : vector<1x1xf32>
      %cst_31 = arith.constant 1.000000e+00 : f32
      %54 = vector.broadcast %cst_31 : f32 to vector<1x1xf32>
      %55 = arith.addf %54, %53 : vector<1x1xf32>
      %56 = arith.divf %54, %55 : vector<1x1xf32>
      %57 = vector.shape_cast %56 : vector<1x1xf32> to vector<1x1x1xf32>
      %c0_32 = arith.constant 0 : index
      %c0_33 = arith.constant 0 : index
      %c0_34 = arith.constant 0 : index
      %58 = vector.load %arg9[%c0_32, %c0_33, %c0_34] : memref<1x1x1xf32, #tpu.memory_space<vmem>>, vector<1x1x1xf32>
      tpu.vector_store %arg9[%c0_32, %c0_33, %c0_34], %57 {strides = array<i32>} : memref<1x1x1xf32, #tpu.memory_space<vmem>>, vector<1x1x1xf32>,
    } else {
    }
    return
  }
  func.func @transform_0(%arg0: i32, %arg1: i32) -> (i32, i32, i32) {
    %c0_i32 = arith.constant 0 : i32
    %c0_i32_0 = arith.constant 0 : i32
    return %arg0, %arg1, %c0_i32 : i32, i32, i32
  }
  func.func @transform_1(%arg0: i32, %arg1: i32) -> (i32, i32) {
    %c0_i32 = arith.constant 0 : i32
    %c0_i32_0 = arith.constant 0 : i32
    %c0_i32_1 = arith.constant 0 : i32
    return %c0_i32, %c0_i32_0 : i32, i32
  }
  func.func @transform_2(%arg0: i32, %arg1: i32) -> (i32, i32) {
    %c0_i32 = arith.constant 0 : i32
    %c0_i32_0 = arith.constant 0 : i32
    %c0_i32_1 = arith.constant 0 : i32
    return %c0_i32, %c0_i32_0 : i32, i32
  }
  func.func @transform_3(%arg0: i32, %arg1: i32) -> (i32, i32) {
    %c0_i32 = arith.constant 0 : i32
    %c0_i32_0 = arith.constant 0 : i32
    %c0_i32_1 = arith.constant 0 : i32
    return %c0_i32, %c0_i32_0 : i32, i32
  }
  func.func @transform_4(%arg0: i32, %arg1: i32) -> (i32, i32) {
    %c0_i32 = arith.constant 0 : i32
    %c0_i32_0 = arith.constant 0 : i32
    %c0_i32_1 = arith.constant 0 : i32
    return %c0_i32, %c0_i32_0 : i32, i32
  }
  func.func @transform_5(%arg0: i32, %arg1: i32) -> (i32, i32) {
    %c0_i32 = arith.constant 0 : i32
    %c0_i32_0 = arith.constant 0 : i32
    %c0_i32_1 = arith.constant 0 : i32
    return %c0_i32, %c0_i32_0 : i32, i32
  }
  func.func @transform_6(%arg0: i32, %arg1: i32) -> (i32, i32) {
    %c0_i32 = arith.constant 0 : i32
    %c0_i32_0 = arith.constant 0 : i32
    %c0_i32_1 = arith.constant 0 : i32
    return %c0_i32, %c0_i32_0 : i32, i32
  }
  func.func @transform_7(%arg0: i32, %arg1: i32) -> (i32, i32, i32) {
    %c0_i32 = arith.constant 0 : i32
    %c0_i32_0 = arith.constant 0 : i32
    %c0_i32_1 = arith.constant 0 : i32
    return %arg0, %c0_i32, %c0_i32_0 : i32, i32, i32
  }
}

</mosaic_0001>

<llo_original>
// kernel: tpu_custom_call.1
$region0: #{tpu_custom_call.1}
  #allocation0 [shape = 'u32[]', space=smem, size = 0x4, offset = 0x4, fixed_abs, tag = 'smem constant byte address 0x4 - core index']
  #allocation1 [shape = 'u32[144,128]{1,0:T(1,128)}', space=vmem, size = 0x12000, scoped, tag = 'internal scratch']
  #allocation2 [shape = 'f32[1,128]{1,0:T(1,128)}', space=vmem, size = 0x200, scoped, tag = 'scratch operand']
  #allocation3 [shape = 'f32[1,1]{1,0:T(1,128)S(1)}', space=vmem, size = 0x200, scoped, tag = 'scoped memory for tpu_custom_call.1']
  %s0 = inlined_call_operand.hbm [shape: bf16[2,608,512], index: 0, kind: input, shape index: {}]
  %s1 = inlined_call_operand.hbm [shape: bf16[512,256], index: 1, kind: input, shape index: {}]
  %s2 = inlined_call_operand.hbm [shape: f32[1,256], index: 2, kind: input, shape index: {}]
  %s3 = inlined_call_operand.hbm [shape: f32[128,128], index: 3, kind: input, shape index: {}]
  %s4 = inlined_call_operand.hbm [shape: f32[1,128], index: 4, kind: input, shape index: {}]
  %s5 = inlined_call_operand.vmem [shape: f32[128,1], index: 5, kind: input, shape index: {}]
  %s6 = inlined_call_operand.<no memory space> [shape: f32[1,1], index: 6, kind: input, shape index: {}]
  %s7 = inlined_call_operand.vmem [shape: f32[2,1,1], index: 7, kind: output, shape index: {}]
  %s8 = sld [smem:[#allocation0]]
  $region89: #{tpu_custom_call.1} parent=0
    _
  %s10 = ssub.s32 1, %s8
  %s11 = scalar_select 0, %s10, %s8
  %v12 = vstv %s6
  %13 = vst [vmem:[#allocation3] sm:$0x1] %v12
  $region1: #{tpu_custom_call.1} parent=0
    #allocation4 [shape = 'u8[622592]{0}', space=vmem, size = 0x98000, scoped, tag = 'input window, operand 0']
    #allocation5 [shape = 's32[2]{0}', space=sflag, size = 0x8, scoped, tag = 'scoped memory for tpu_custom_call.1']
    #allocation6 [shape = 'u8[262144]{0}', space=vmem, size = 0x40000, scoped, tag = 'input window, operand 1, single buffered']
    #allocation7 [shape = 's32[1]{0}', space=sflag, size = 0x4, scoped, tag = 'scoped memory for tpu_custom_call.1']
    #allocation8 [shape = 'u8[1024]{0}', space=vmem, size = 0x400, scoped, tag = 'input window, operand 2, single buffered']
    #allocation9 [shape = 'u8[65536]{0}', space=vmem, size = 0x10000, scoped, tag = 'input window, operand 3, single buffered']
    #allocation10 [shape = 's32[1]{0}', space=sflag, size = 0x4, scoped, tag = 'scoped memory for tpu_custom_call.1']
    #allocation11 [shape = 'u8[512]{0}', space=vmem, size = 0x400, scoped, tag = 'input window, operand 4, single buffered']
    %14 = vsyncpa [#allocation5], 0
    %s15 = scalar_lea.sflag [#allocation5], 1
    %16 = vsyncpa %s15, 0
    %17 = vsyncpa [#allocation7], 0
    %18 = vsyncpa [#allocation10], 0
    loop: start=0, step=1, limit=6
    $region2: #{tpu_custom_call.1} parent=1 // loop_pre_header
      _
    $region3: #{tpu_custom_call.1} parent=1 // loop_header
      %s20 = sphi 0, %s24
      %p21 = scmp.ge.s32.totalorder %s20, 6
      %s27 = sphi 0, %s39
      %s28 = sphi 0, %s35
      %s29 = sphi 0, %s27
      %s30 = sphi 0, %s28
      %s31 = sphi 0, %s29
      %s32 = sphi 0, %s30
      %s44 = sphi 0, %s46
      %s47 = sphi 0, %s44
      %s48 = sphi 0, %s47
      %s64 = sphi 0, %s48
      %s68 = sphi 0, %s68
      %s70 = sphi 0, %s68
      %s71 = sphi 0, %s70
      %s85 = sphi 0, %s71
      %s89 = sphi 0, %s89
      %s91 = sphi 0, %s89
      %s92 = sphi 0, %s91
      %s106 = sphi 0, %s92
      %s110 = sphi 0, %s110
      %s112 = sphi 0, %s110
      %s113 = sphi 0, %s112
      %s127 = sphi 0, %s113
      %s131 = sphi 0, %s131
      %s133 = sphi 0, %s131
      %s134 = sphi 0, %s133
      %s148 = sphi 0, %s134
      %s152 = sphi 0, %s152
      %s154 = sphi 0, %s152
      %s155 = sphi 0, %s154
      %s169 = sphi 0, %s155
      %s173 = sphi 0, %s173
      %s175 = sphi 0, %s173
      %s176 = sphi 0, %s175
      %s190 = sphi 0, %s176
      %s196 = sphi 0, %s198
      %s199 = sphi 0, %s196
      %s200 = sphi 0, %s199
      %s216 = sphi 0, %s200
    $region4: #{tpu_custom_call.1} parent=1 // loop_header_branch
      %23 = sbr.rel (%p21) target = $region8
    $region5: #{tpu_custom_call.1} parent=1 // loop_body
      %s25 = ssub.s32 %s20, 1
      %s26 = ssub.s32 %s20, 2
      %s33 = sadd.s32 1, %s28
      %p34 = scmp.ge.s32.totalorder %s33, 2
      %s35 = scalar_select %p34, 0, %s33
      %s36 = sadd.s32 1, %s27
      %s37 = scalar_select %p34, %s36, %s27
      %p38 = scmp.ge.s32.totalorder %s37, 2
      %s39 = scalar_select %p38, 0, %s37
      %s40 = ssub.s32 %s27, %s39
      %s41 = ssub.s32 %s28, %s35
      %s42 = sor.u32 %s40, %s41
      %p43 = scmp.eq.s32.totalorder %s42, 0
      %s45 = sadd.s32 %s44, 1
      %s46 = scalar_select %p43, %s44, %s45
      %p49 = pneg %p43
      %p50 = scmp.eq.s32.totalorder %s20, 3
      %p51 = por %p49, %p50
      %p52 = scmp.ne.s32.totalorder %s44, %s47
      %p53 = scmp.eq.s32.totalorder %s20, 0
      %p54 = por %p52, %p53
      %p55 = scmp.ne.s32.totalorder %s44, %s47
      %p56 = scmp.eq.s32.totalorder %s25, 3
      %p57 = por %p55, %p56
      %p58 = scmp.ne.s32.totalorder %s47, %s48
      %p59 = scmp.eq.s32.totalorder %s25, 0
      %p60 = por %p58, %p59
      %p61 = scmp.ne.s32.totalorder %s47, %s48
      %p62 = scmp.eq.s32.totalorder %s26, 3
      %p63 = por %p61, %p62
      %p65 = scmp.ne.s32.totalorder %s48, %s64
      %p66 = scmp.eq.s32.totalorder %s26, 0
      %p67 = por %p65, %p66
      %s69 = sadd.s32 %s68, 1
      %p72 = scmp.eq.s32.totalorder %s20, 3
      %p73 = scmp.ne.s32.totalorder %s68, %s70
      %p74 = scmp.eq.s32.totalorder %s20, 0
      %p75 = por %p73, %p74
      %p76 = scmp.ne.s32.totalorder %s68, %s70
      %p77 = scmp.eq.s32.totalorder %s25, 3
      %p78 = por %p76, %p77
      %p79 = scmp.ne.s32.totalorder %s70, %s71
      %p80 = scmp.eq.s32.totalorder %s25, 0
      %p81 = por %p79, %p80
      %p82 = scmp.ne.s32.totalorder %s70, %s71
      %p83 = scmp.eq.s32.totalorder %s26, 3
      %p84 = por %p82, %p83
      %p86 = scmp.ne.s32.totalorder %s71, %s85
      %p87 = scmp.eq.s32.totalorder %s26, 0
      %p88 = por %p86, %p87
      %s90 = sadd.s32 %s89, 1
      %p93 = scmp.eq.s32.totalorder %s20, 3
      %p94 = scmp.ne.s32.totalorder %s89, %s91
      %p95 = scmp.eq.s32.totalorder %s20, 0
      %p96 = por %p94, %p95
      %p97 = scmp.ne.s32.totalorder %s89, %s91
      %p98 = scmp.eq.s32.totalorder %s25, 3
      %p99 = por %p97, %p98
      %p100 = scmp.ne.s32.totalorder %s91, %s92
      %p101 = scmp.eq.s32.totalorder %s25, 0
      %p102 = por %p100, %p101
      %p103 = scmp.ne.s32.totalorder %s91, %s92
      %p104 = scmp.eq.s32.totalorder %s26, 3
      %p105 = por %p103, %p104
      %p107 = scmp.ne.s32.totalorder %s92, %s106
      %p108 = scmp.eq.s32.totalorder %s26, 0
      %p109 = por %p107, %p108
      %s111 = sadd.s32 %s110, 1
      %p114 = scmp.eq.s32.totalorder %s20, 3
      %p115 = scmp.ne.s32.totalorder %s110, %s112
      %p116 = scmp.eq.s32.totalorder %s20, 0
      %p117 = por %p115, %p116
      %p118 = scmp.ne.s32.totalorder %s110, %s112
      %p119 = scmp.eq.s32.totalorder %s25, 3
      %p120 = por %p118, %p119
      %p121 = scmp.ne.s32.totalorder %s112, %s113
      %p122 = scmp.eq.s32.totalorder %s25, 0
      %p123 = por %p121, %p122
      %p124 = scmp.ne.s32.totalorder %s112, %s113
      %p125 = scmp.eq.s32.totalorder %s26, 3
      %p126 = por %p124, %p125
      %p128 = scmp.ne.s32.totalorder %s113, %s127
      %p129 = scmp.eq.s32.totalorder %s26, 0
      %p130 = por %p128, %p129
      %s132 = sadd.s32 %s131, 1
      %p135 = scmp.eq.s32.totalorder %s20, 3
      %p136 = scmp.ne.s32.totalorder %s131, %s133
      %p137 = scmp.eq.s32.totalorder %s20, 0
      %p138 = por %p136, %p137
      %p139 = scmp.ne.s32.totalorder %s131, %s133
      %p140 = scmp.eq.s32.totalorder %s25, 3
      %p141 = por %p139, %p140
      %p142 = scmp.ne.s32.totalorder %s133, %s134
      %p143 = scmp.eq.s32.totalorder %s25, 0
      %p144 = por %p142, %p143
      %p145 = scmp.ne.s32.totalorder %s133, %s134
      %p146 = scmp.eq.s32.totalorder %s26, 3
      %p147 = por %p145, %p146
      %p149 = scmp.ne.s32.totalorder %s134, %s148
      %p150 = scmp.eq.s32.totalorder %s26, 0
      %p151 = por %p149, %p150
      %s153 = sadd.s32 %s152, 1
      %p156 = scmp.eq.s32.totalorder %s20, 3
      %p157 = scmp.ne.s32.totalorder %s152, %s154
      %p158 = scmp.eq.s32.totalorder %s20, 0
      %p159 = por %p157, %p158
      %p160 = scmp.ne.s32.totalorder %s152, %s154
      %p161 = scmp.eq.s32.totalorder %s25, 3
      %p162 = por %p160, %p161
      %p163 = scmp.ne.s32.totalorder %s154, %s155
      %p164 = scmp.eq.s32.totalorder %s25, 0
      %p165 = por %p163, %p164
      %p166 = scmp.ne.s32.totalorder %s154, %s155
      %p167 = scmp.eq.s32.totalorder %s26, 3
      %p168 = por %p166, %p167
      %p170 = scmp.ne.s32.totalorder %s155, %s169
      %p171 = scmp.eq.s32.totalorder %s26, 0
      %p172 = por %p170, %p171
      %s174 = sadd.s32 %s173, 1
      %p177 = scmp.eq.s32.totalorder %s20, 3
      %p178 = scmp.ne.s32.totalorder %s173, %s175
      %p179 = scmp.eq.s32.totalorder %s20, 0
      %p180 = por %p178, %p179
      %p181 = scmp.ne.s32.totalorder %s173, %s175
      %p182 = scmp.eq.s32.totalorder %s25, 3
      %p183 = por %p181, %p182
      %p184 = scmp.ne.s32.totalorder %s175, %s176
      %p185 = scmp.eq.s32.totalorder %s25, 0
      %p186 = por %p184, %p185
      %p187 = scmp.ne.s32.totalorder %s175, %s176
      %p188 = scmp.eq.s32.totalorder %s26, 3
      %p189 = por %p187, %p188
      %p191 = scmp.ne.s32.totalorder %s176, %s190
      %p192 = scmp.eq.s32.totalorder %s26, 0
      %p193 = por %p191, %p192
      %s194 = ssub.s32 %s27, %s39
      %p195 = scmp.eq.s32.totalorder %s194, 0
      %s197 = sadd.s32 %s196, 1
      %s198 = scalar_select %p195, %s196, %s197
      %p201 = pneg %p195
      %p202 = scmp.eq.s32.totalorder %s20, 3
      %p203 = por %p201, %p202
      %p204 = scmp.ne.s32.totalorder %s196, %s199
      %p205 = scmp.eq.s32.totalorder %s20, 0
      %p206 = por %p204, %p205
      %p207 = scmp.ne.s32.totalorder %s196, %s199
      %p208 = scmp.eq.s32.totalorder %s25, 3
      %p209 = por %p207, %p208
      %p210 = scmp.ne.s32.totalorder %s199, %s200
      %p211 = scmp.eq.s32.totalorder %s25, 0
      %p212 = por %p210, %p211
      %p213 = scmp.ne.s32.totalorder %s199, %s200
      %p214 = scmp.eq.s32.totalorder %s26, 3
      %p215 = por %p213, %p214
      %p217 = scmp.ne.s32.totalorder %s200, %s216
      %p218 = scmp.eq.s32.totalorder %s26, 0
      %p219 = por %p217, %p218
      %p220 = scmp.le.s32.totalorder 1, %s20
      %p221 = scmp.lt.s32.totalorder %s20, 5
      %p222 = pnand %p220, %p221
      %p223 = pneg %p222
      // Predicated region
      $region9: #{tpu_custom_call.1} parent=5 // pred_check
        _
      $region10: #{tpu_custom_call.1} parent=5 // pred_check_branch
        %225 = sbr.rel (%p222) target = $region12
      $region11: #{tpu_custom_call.1} parent=5 // pred_region
        %s226 = ssub.s32 %s20, 1
        // Predicated region
        $region13: #{tpu_custom_call.1} parent=11 // pred_check
          %p227 = pneg %p81
        $region14: #{tpu_custom_call.1} parent=11 // pred_check_branch
          %229 = sbr.rel (%p227) target = $region16
        $region15: #{tpu_custom_call.1} parent=11 // pred_region
          %s231 = ssub.s32 8192, 8192
          %232 = vsyncadd [#allocation7], %s231
          %s233 = sshll.u32 [#allocation6], 4
          %s234 = int_to_ptr.vmem [resolvable:$true] %s233
          %239 = dma.hbm_to_vmem [thread:$0]  %s1, 8192, %s234, [#allocation7], 128, 128, 8
        $region16: #{tpu_custom_call.1} parent=11 // pred_fallthru
          _
        // Predicated region
        $region17: #{tpu_custom_call.1} parent=11 // pred_check
          %p240 = pneg %p102
        $region18: #{tpu_custom_call.1} parent=11 // pred_check_branch
          %242 = sbr.rel (%p240) target = $region20
        $region19: #{tpu_custom_call.1} parent=11 // pred_region
          %s244 = ssub.s32 32, 32
          %245 = vsyncadd [#allocation7], %s244
          %s247 = sshll.u32 [#allocation8], 4
          %s248 = int_to_ptr.vmem [resolvable:$true] %s247
          %250 = dma.hbm_to_vmem [thread:$0]  %s2, 32, %s248, [#allocation7]
        $region20: #{tpu_custom_call.1} parent=11 // pred_fallthru
          _
        // Predicated region
        $region21: #{tpu_custom_call.1} parent=11 // pred_check
          %p251 = pneg %p123
        $region22: #{tpu_custom_call.1} parent=11 // pred_check_branch
          %253 = sbr.rel (%p251) target = $region24
        $region23: #{tpu_custom_call.1} parent=11 // pred_region
          %s255 = ssub.s32 2048, 2048
          %256 = vsyncadd [#allocation10], %s255
          %s257 = sshll.u32 [#allocation9], 4
          %s258 = int_to_ptr.vmem [resolvable:$true] %s257
          %263 = dma.hbm_to_vmem [thread:$0]  %s3, 2048, %s258, [#allocation10], 128, 128, 8
        $region24: #{tpu_custom_call.1} parent=11 // pred_fallthru
          _
        // Predicated region
        $region25: #{tpu_custom_call.1} parent=11 // pred_check
          %p264 = pneg %p144
        $region26: #{tpu_custom_call.1} parent=11 // pred_check_branch
          %266 = sbr.rel (%p264) target = $region28
        $region27: #{tpu_custom_call.1} parent=11 // pred_region
          %s268 = ssub.s32 16, 16
          %269 = vsyncadd [#allocation10], %s268
          %s271 = sshll.u32 [#allocation11], 4
          %s272 = int_to_ptr.vmem [resolvable:$true] %s271
          %274 = dma.hbm_to_vmem [thread:$0]  %s4, 16, %s272, [#allocation10]
        $region28: #{tpu_custom_call.1} parent=11 // pred_fallthru
          _
        // Predicated region
        $region29: #{tpu_custom_call.1} parent=11 // pred_check
          %p275 = pneg %p165
        $region30: #{tpu_custom_call.1} parent=11 // pred_check_branch
          %277 = sbr.rel (%p275) target = $region32
        $region31: #{tpu_custom_call.1} parent=11 // pred_region
          _
        $region32: #{tpu_custom_call.1} parent=11 // pred_fallthru
          _
        // Predicated region
        $region33: #{tpu_custom_call.1} parent=11 // pred_check
          %p278 = pneg %p186
        $region34: #{tpu_custom_call.1} parent=11 // pred_check_branch
          %280 = sbr.rel (%p278) target = $region36
        $region35: #{tpu_custom_call.1} parent=11 // pred_region
          _
        $region36: #{tpu_custom_call.1} parent=11 // pred_fallthru
          _
      $region12: #{tpu_custom_call.1} parent=5 // pred_fallthru
        _
      %p281 = scmp.lt.s32.totalorder %s20, 4
      // Predicated region
      $region37: #{tpu_custom_call.1} parent=5 // pred_check
        %p282 = pneg %p281
      $region38: #{tpu_custom_call.1} parent=5 // pred_check_branch
        %284 = sbr.rel (%p282) target = $region40
      $region39: #{tpu_custom_call.1} parent=5 // pred_region
        // Predicated region
        $region41: #{tpu_custom_call.1} parent=39 // pred_check
          %p285 = pneg %p54
        $region42: #{tpu_custom_call.1} parent=39 // pred_check_branch
          %287 = sbr.rel (%p285) target = $region44
        $region43: #{tpu_custom_call.1} parent=39 // pred_region
          %s288 = sand.u32 %s44, 1
          %s289 = scalar_lea.sflag [#allocation5], %s288
          %s290 = sand.u32 %s44, 1
          %s291 = smul.addr %s290, 608
          %s292 = scalar_lea.vmem [#allocation4], %s291
          %s293 = smul.u32 38, %s28
          %s295 = ssub.s32 9728, 9728
          %296 = vsyncadd %s289, %s295
          %s297 = smul.addr %s293, 4
          %s298 = smul.addr %s27, 304
          %s299 = sadd.s32 %s297, %s298
          %s300 = smul.addr %s299, 64
          %s301 = scalar_lea.hbm %s0, %s300
          %s302 = sshll.u32 %s292, 4
          %s303 = int_to_ptr.vmem [resolvable:$true] %s302
          %308 = dma.hbm_to_vmem [thread:$0]  %s301, 9728, %s303, %s289, 256, 256, 16
        $region44: #{tpu_custom_call.1} parent=39 // pred_fallthru
          _
      $region40: #{tpu_custom_call.1} parent=5 // pred_fallthru
        _
      %p309 = scmp.le.s32.totalorder 1, %s20
      %p310 = scmp.lt.s32.totalorder %s20, 5
      %p311 = pnand %p309, %p310
      %p312 = pneg %p311
      // Predicated region
      $region45: #{tpu_custom_call.1} parent=5 // pred_check
        _
      $region46: #{tpu_custom_call.1} parent=5 // pred_check_branch
        %314 = sbr.rel (%p311) target = $region48
      $region47: #{tpu_custom_call.1} parent=5 // pred_region
        %s315 = ssub.s32 %s20, 1
        %s316 = sand.u32 %s47, 1
        %s317 = scalar_lea.sflag [#allocation5], %s316
        %s318 = sand.u32 %s47, 1
        %s319 = smul.addr %s318, 608
        %s320 = scalar_lea.vmem [#allocation4], %s319
        // Predicated region
        $region49: #{tpu_custom_call.1} parent=47 // pred_check
          %p321 = pneg %p60
        $region50: #{tpu_custom_call.1} parent=47 // pred_check_branch
          %323 = sbr.rel (%p321) target = $region52
        $region51: #{tpu_custom_call.1} parent=47 // pred_region
          %324 = dma.done %s317, 9728
        $region52: #{tpu_custom_call.1} parent=47 // pred_fallthru
          _
        // Predicated region
        $region53: #{tpu_custom_call.1} parent=47 // pred_check
          %p325 = pneg %p81
        $region54: #{tpu_custom_call.1} parent=47 // pred_check_branch
          %327 = sbr.rel (%p325) target = $region56
        $region55: #{tpu_custom_call.1} parent=47 // pred_region
          %328 = dma.done [#allocation7], 8192
        $region56: #{tpu_custom_call.1} parent=47 // pred_fallthru
          _
        // Predicated region
        $region57: #{tpu_custom_call.1} parent=47 // pred_check
          %p329 = pneg %p102
        $region58: #{tpu_custom_call.1} parent=47 // pred_check_branch
          %331 = sbr.rel (%p329) target = $region60
        $region59: #{tpu_custom_call.1} parent=47 // pred_region
          %332 = dma.done [#allocation7], 32
        $region60: #{tpu_custom_call.1} parent=47 // pred_fallthru
          _
        // Predicated region
        $region61: #{tpu_custom_call.1} parent=47 // pred_check
          %p333 = pneg %p123
        $region62: #{tpu_custom_call.1} parent=47 // pred_check_branch
          %335 = sbr.rel (%p333) target = $region64
        $region63: #{tpu_custom_call.1} parent=47 // pred_region
          %336 = dma.done [#allocation10], 2048
        $region64: #{tpu_custom_call.1} parent=47 // pred_fallthru
          _
        // Predicated region
        $region65: #{tpu_custom_call.1} parent=47 // pred_check
          %p337 = pneg %p144
        $region66: #{tpu_custom_call.1} parent=47 // pred_check_branch
          %339 = sbr.rel (%p337) target = $region68
        $region67: #{tpu_custom_call.1} parent=47 // pred_region
          %340 = dma.done [#allocation10], 16
        $region68: #{tpu_custom_call.1} parent=47 // pred_fallthru
          _
        %s341 = sand.u32 %s47, 1
        %s342 = scalar_lea.sflag [#allocation5], %s341
        %s343 = sand.u32 %s47, 1
        %s344 = smul.addr %s343, 608
        %s345 = scalar_lea.vmem [#allocation4], %s344
        %p346 = pneg %p60
        %p347 = pneg %p57
        %p348 = pneg %p81
        %p349 = pneg %p78
        %p350 = pneg %p102
        %p351 = pneg %p99
        %p352 = pneg %p123
        %p353 = pneg %p120
        %p354 = pneg %p144
        %p355 = pneg %p141
        %p356 = pneg %p165
        %p357 = pneg %p162
        %p358 = pneg %p186
        %p359 = pneg %p183
        %p360 = pneg %p212
        %p361 = pneg %p209
        %p362 = scmp.lt.s32.totalorder %s29, 1
        %s363 = scalar_select %p362, %s29, 1
        %s364 = scalar_lea.vmem %s7, %s363
        %s365 = smul.u32 38, %s30
        %p366 = scmp.lt.s32.totalorder %s29, 1
        %s367 = scalar_select %p366, %s29, 1
        %s368 = scalar_lea.vmem %s7, %s367
        %p369 = scmp.eq.s32.totalorder %s30, 0
        // Predicated region
        $region69: #{tpu_custom_call.1} parent=47 // pred_check
          %p370 = pneg %p369
        $region70: #{tpu_custom_call.1} parent=47 // pred_check_branch
          %372 = sbr.rel (%p370) target = $region72
        $region71: #{tpu_custom_call.1} parent=47 // pred_region
          %373 = vst [vmem:[#allocation2] sm:$0x1] -inf
        $region72: #{tpu_custom_call.1} parent=47 // pred_fallthru
          _
        %v374 = vld [vmem:[%s320] sm:$0xff]
        %v375 = vld [vmem:[%s320 + $0x8] sm:$0xff]
        %v376 = vld [vmem:[%s320 + $0x10] sm:$0xff]
        %v377 = vld [vmem:[%s320 + $0x18] sm:$0xff]
        %v378 = vld [vmem:[%s320 + $0x20] sm:$0xff]
        %v379 = vld [vmem:[%s320 + $0x28] sm:$0xff]
        %v380 = vld [vmem:[%s320 + $0x30] sm:$0xff]
        %v381 = vld [vmem:[%s320 + $0x38] sm:$0xff]
        %v382 = vld [vmem:[%s320 + $0x40] sm:$0xff]
        %v383 = vld [vmem:[%s320 + $0x48] sm:$0xff]
        %v384 = vld [vmem:[%s320 + $0x50] sm:$0xff]
        %v385 = vld [vmem:[%s320 + $0x58] sm:$0xff]
        %v386 = vld [vmem:[%s320 + $0x60] sm:$0xff]
        %v387 = vld [vmem:[%s320 + $0x68] sm:$0xff]
        %v388 = vld [vmem:[%s320 + $0x70] sm:$0xff]
        %v389 = vld [vmem:[%s320 + $0x78] sm:$0xff]
        %v390 = vld [vmem:[%s320 + $0x80] sm:$0xff]
        %v391 = vld [vmem:[%s320 + $0x88] sm:$0xff]
        %v392 = vld [vmem:[%s320 + $0x90] sm:$0xff]
        %v393 = vld [vmem:[%s320 + $0x98] sm:$0xff]
        %v394 = vld [vmem:[%s320 + $0xa0] sm:$0xff]
        %v395 = vld [vmem:[%s320 + $0xa8] sm:$0xff]
        %v396 = vld [vmem:[%s320 + $0xb0] sm:$0xff]
        %v397 = vld [vmem:[%s320 + $0xb8] sm:$0xff]
        %v398 = vld [vmem:[%s320 + $0xc0] sm:$0xff]
        %v399 = vld [vmem:[%s320 + $0xc8] sm:$0xff]
        %v400 = vld [vmem:[%s320 + $0xd0] sm:$0xff]
        %v401 = vld [vmem:[%s320 + $0xd8] sm:$0xff]
        %v402 = vld [vmem:[%s320 + $0xe0] sm:$0xff]
        %v403 = vld [vmem:[%s320 + $0xe8] sm:$0xff]
        %v404 = vld [vmem:[%s320 + $0xf0] sm:$0xff]
        %v405 = vld [vmem:[%s320 + $0xf8] sm:$0xff]
        %v406 = vld [vmem:[%s320 + $0x100] sm:$0xff]
        %v407 = vld [vmem:[%s320 + $0x108] sm:$0xff]
        %v408 = vld [vmem:[%s320 + $0x110] sm:$0xff]
        %v409 = vld [vmem:[%s320 + $0x118] sm:$0xff]
        %v410 = vld [vmem:[%s320 + $0x120] sm:$0xff]
        %v411 = vld [vmem:[%s320 + $0x128] sm:$0xff]
        %v412 = vld [vmem:[%s320 + $0x130] sm:$0xff]
        %v413 = vld [vmem:[%s320 + $0x138] sm:$0xff]
        %v414 = vld [vmem:[%s320 + $0x140] sm:$0xff]
        %v415 = vld [vmem:[%s320 + $0x148] sm:$0xff]
        %v416 = vld [vmem:[%s320 + $0x150] sm:$0xff]
        %v417 = vld [vmem:[%s320 + $0x158] sm:$0xff]
        %v418 = vld [vmem:[%s320 + $0x160] sm:$0xff]
        %v419 = vld [vmem:[%s320 + $0x168] sm:$0xff]
        %v420 = vld [vmem:[%s320 + $0x170] sm:$0xff]
        %v421 = vld [vmem:[%s320 + $0x178] sm:$0xff]
        %v422 = vld [vmem:[%s320 + $0x180] sm:$0xff]
        %v423 = vld [vmem:[%s320 + $0x188] sm:$0xff]
        %v424 = vld [vmem:[%s320 + $0x190] sm:$0xff]
        %v425 = vld [vmem:[%s320 + $0x198] sm:$0xff]
        %v426 = vld [vmem:[%s320 + $0x1a0] sm:$0xff]
        %v427 = vld [vmem:[%s320 + $0x1a8] sm:$0xff]
        %v428 = vld [vmem:[%s320 + $0x1b0] sm:$0xff]
        %v429 = vld [vmem:[%s320 + $0x1b8] sm:$0xff]
        %v430 = vld [vmem:[%s320 + $0x1c0] sm:$0xff]
        %v431 = vld [vmem:[%s320 + $0x1c8] sm:$0xff]
        %v432 = vld [vmem:[%s320 + $0x1d0] sm:$0xff]
        %v433 = vld [vmem:[%s320 + $0x1d8] sm:$0xff]
        %v434 = vld [vmem:[%s320 + $0x1e0] sm:$0xff]
        %v435 = vld [vmem:[%s320 + $0x1e8] sm:$0xff]
        %v436 = vld [vmem:[%s320 + $0x1f0] sm:$0xff]
        %v437 = vld [vmem:[%s320 + $0x1f8] sm:$0xff]
        %v438 = vld [vmem:[%s320 + $0x200] sm:$0xff]
        %v439 = vld [vmem:[%s320 + $0x208] sm:$0xff]
        %v440 = vld [vmem:[%s320 + $0x210] sm:$0xff]
        %v441 = vld [vmem:[%s320 + $0x218] sm:$0xff]
        %v442 = vld [vmem:[%s320 + $0x220] sm:$0xff]
        %v443 = vld [vmem:[%s320 + $0x228] sm:$0xff]
        %v444 = vld [vmem:[%s320 + $0x230] sm:$0xff]
        %v445 = vld [vmem:[%s320 + $0x238] sm:$0xff]
        %v446 = vld [vmem:[%s320 + $0x240] sm:$0xff]
        %v447 = vld [vmem:[%s320 + $0x248] sm:$0xff]
        %v448 = vld [vmem:[%s320 + $0x250] sm:$0xff]
        %v449 = vld [vmem:[%s320 + $0x258] sm:$0xff]
        %v450 = vld [vmem:[#allocation6] sm:$0xff]
        %v451 = vld [vmem:[#allocation6 + $0x8] sm:$0xff]
        %v452 = vld [vmem:[#allocation6 + $0x10] sm:$0xff]
        %v453 = vld [vmem:[#allocation6 + $0x18] sm:$0xff]
        %v454 = vld [vmem:[#allocation6 + $0x20] sm:$0xff]
        %v455 = vld [vmem:[#allocation6 + $0x28] sm:$0xff]
        %v456 = vld [vmem:[#allocation6 + $0x30] sm:$0xff]
        %v457 = vld [vmem:[#allocation6 + $0x38] sm:$0xff]
        %v458 = vld [vmem:[#allocation6 + $0x40] sm:$0xff]
        %v459 = vld [vmem:[#allocation6 + $0x48] sm:$0xff]
        %v460 = vld [vmem:[#allocation6 + $0x50] sm:$0xff]
        %v461 = vld [vmem:[#allocation6 + $0x58] sm:$0xff]
        %v462 = vld [vmem:[#allocation6 + $0x60] sm:$0xff]
        %v463 = vld [vmem:[#allocation6 + $0x68] sm:$0xff]
        %v464 = vld [vmem:[#allocation6 + $0x70] sm:$0xff]
        %v465 = vld [vmem:[#allocation6 + $0x78] sm:$0xff]
        %v466 = vld [vmem:[#allocation6 + $0x80] sm:$0xff]
        %v467 = vld [vmem:[#allocation6 + $0x88] sm:$0xff]
        %v468 = vld [vmem:[#allocation6 + $0x90] sm:$0xff]
        %v469 = vld [vmem:[#allocation6 + $0x98] sm:$0xff]
        %v470 = vld [vmem:[#allocation6 + $0xa0] sm:$0xff]
        %v471 = vld [vmem:[#allocation6 + $0xa8] sm:$0xff]
        %v472 = vld [vmem:[#allocation6 + $0xb0] sm:$0xff]
        %v473 = vld [vmem:[#allocation6 + $0xb8] sm:$0xff]
        %v474 = vld [vmem:[#allocation6 + $0xc0] sm:$0xff]
        %v475 = vld [vmem:[#allocation6 + $0xc8] sm:$0xff]
        %v476 = vld [vmem:[#allocation6 + $0xd0] sm:$0xff]
        %v477 = vld [vmem:[#allocation6 + $0xd8] sm:$0xff]
        %v478 = vld [vmem:[#allocation6 + $0xe0] sm:$0xff]
        %v479 = vld [vmem:[#allocation6 + $0xe8] sm:$0xff]
        %v480 = vld [vmem:[#allocation6 + $0xf0] sm:$0xff]
        %v481 = vld [vmem:[#allocation6 + $0xf8] sm:$0xff]
        %v482 = vld [vmem:[#allocation6 + $0x100] sm:$0xff]
        %v483 = vld [vmem:[#allocation6 + $0x108] sm:$0xff]
        %v484 = vld [vmem:[#allocation6 + $0x110] sm:$0xff]
        %v485 = vld [vmem:[#allocation6 + $0x118] sm:$0xff]
        %v486 = vld [vmem:[#allocation6 + $0x120] sm:$0xff]
        %v487 = vld [vmem:[#allocation6 + $0x128] sm:$0xff]
        %v488 = vld [vmem:[#allocation6 + $0x130] sm:$0xff]
        %v489 = vld [vmem:[#allocation6 + $0x138] sm:$0xff]
        %v490 = vld [vmem:[#allocation6 + $0x140] sm:$0xff]
        %v491 = vld [vmem:[#allocation6 + $0x148] sm:$0xff]
        %v492 = vld [vmem:[#allocation6 + $0x150] sm:$0xff]
        %v493 = vld [vmem:[#allocation6 + $0x158] sm:$0xff]
        %v494 = vld [vmem:[#allocation6 + $0x160] sm:$0xff]
        %v495 = vld [vmem:[#allocation6 + $0x168] sm:$0xff]
        %v496 = vld [vmem:[#allocation6 + $0x170] sm:$0xff]
        %v497 = vld [vmem:[#allocation6 + $0x178] sm:$0xff]
        %v498 = vld [vmem:[#allocation6 + $0x180] sm:$0xff]
        %v499 = vld [vmem:[#allocation6 + $0x188] sm:$0xff]
        %v500 = vld [vmem:[#allocation6 + $0x190] sm:$0xff]
        %v501 = vld [vmem:[#allocation6 + $0x198] sm:$0xff]
        %v502 = vld [vmem:[#allocation6 + $0x1a0] sm:$0xff]
        %v503 = vld [vmem:[#allocation6 + $0x1a8] sm:$0xff]
        %v504 = vld [vmem:[#allocation6 + $0x1b0] sm:$0xff]
        %v505 = vld [vmem:[#allocation6 + $0x1b8] sm:$0xff]
        %v506 = vld [vmem:[#allocation6 + $0x1c0] sm:$0xff]
        %v507 = vld [vmem:[#allocation6 + $0x1c8] sm:$0xff]
        %v508 = vld [vmem:[#allocation6 + $0x1d0] sm:$0xff]
        %v509 = vld [vmem:[#allocation6 + $0x1d8] sm:$0xff]
        %v510 = vld [vmem:[#allocation6 + $0x1e0] sm:$0xff]
        %v511 = vld [vmem:[#allocation6 + $0x1e8] sm:$0xff]
        %v512 = vld [vmem:[#allocation6 + $0x1f0] sm:$0xff]
        %v513 = vld [vmem:[#allocation6 + $0x1f8] sm:$0xff]
        %v514 = vld [vmem:[#allocation8] sm:$0x3]
        %v516 = vlaneseq
        %v517 = vshrl.u32 %v516, 7
        %v518 = vsub.s32 0, %v517
        %v519 = vrot.slane %v514, %v518
        %v520 = vlaneseq
        %v521 = vshrl.u32 %v520, 7
        %v522 = vsub.s32 1, %v521
        %v523 = vrot.slane %v514, %v522
        %v602 = vunpack.c.l.b16 %v374
        %v603 = vunpack.c.h.b16 %v374
        %v604 = vunpack.c.l.b16 %v375
        %v605 = vunpack.c.h.b16 %v375
        %v606 = vunpack.c.l.b16 %v376
        %v607 = vunpack.c.h.b16 %v376
        %v608 = vunpack.c.l.b16 %v377
        %v609 = vunpack.c.h.b16 %v377
        %v610 = vunpack.c.l.b16 %v378
        %v611 = vunpack.c.h.b16 %v378
        %v612 = vunpack.c.l.b16 %v379
        %v613 = vunpack.c.h.b16 %v379
        %v614 = vunpack.c.l.b16 %v380
        %v615 = vunpack.c.h.b16 %v380
        %v616 = vunpack.c.l.b16 %v381
        %v617 = vunpack.c.h.b16 %v381
        %v618 = vunpack.c.l.b16 %v382
        %v619 = vunpack.c.h.b16 %v382
        %v620 = vunpack.c.l.b16 %v383
        %v621 = vunpack.c.h.b16 %v383
        %v622 = vunpack.c.l.b16 %v384
        %v623 = vunpack.c.h.b16 %v384
        %v624 = vunpack.c.l.b16 %v385
        %v625 = vunpack.c.h.b16 %v385
        %v626 = vunpack.c.l.b16 %v386
        %v627 = vunpack.c.h.b16 %v386
        %v628 = vunpack.c.l.b16 %v387
        %v629 = vunpack.c.h.b16 %v387
        %v630 = vunpack.c.l.b16 %v388
        %v631 = vunpack.c.h.b16 %v388
        %v632 = vunpack.c.l.b16 %v389
        %v633 = vunpack.c.h.b16 %v389
        %v634 = vunpack.c.l.b16 %v390
        %v635 = vunpack.c.h.b16 %v390
        %v636 = vunpack.c.l.b16 %v391
        %v637 = vunpack.c.h.b16 %v391
        %v638 = vunpack.c.l.b16 %v392
        %v639 = vunpack.c.h.b16 %v392
        %v640 = vunpack.c.l.b16 %v393
        %v641 = vunpack.c.h.b16 %v393
        %v642 = vunpack.c.l.b16 %v394
        %v643 = vunpack.c.h.b16 %v394
        %v644 = vunpack.c.l.b16 %v395
        %v645 = vunpack.c.h.b16 %v395
        %v646 = vunpack.c.l.b16 %v396
        %v647 = vunpack.c.h.b16 %v396
        %v648 = vunpack.c.l.b16 %v397
        %v649 = vunpack.c.h.b16 %v397
        %v650 = vunpack.c.l.b16 %v398
        %v651 = vunpack.c.h.b16 %v398
        %v652 = vunpack.c.l.b16 %v399
        %v653 = vunpack.c.h.b16 %v399
        %v654 = vunpack.c.l.b16 %v400
        %v655 = vunpack.c.h.b16 %v400
        %v656 = vunpack.c.l.b16 %v401
        %v657 = vunpack.c.h.b16 %v401
        %v658 = vunpack.c.l.b16 %v402
        %v659 = vunpack.c.h.b16 %v402
        %v660 = vunpack.c.l.b16 %v403
        %v661 = vunpack.c.h.b16 %v403
        %v662 = vunpack.c.l.b16 %v404
        %v663 = vunpack.c.h.b16 %v404
        %v664 = vunpack.c.l.b16 %v405
        %v665 = vunpack.c.h.b16 %v405
        %v666 = vunpack.c.l.b16 %v406
        %v667 = vunpack.c.h.b16 %v406
        %v668 = vunpack.c.l.b16 %v407
        %v669 = vunpack.c.h.b16 %v407
        %v670 = vunpack.c.l.b16 %v408
        %v671 = vunpack.c.h.b16 %v408
        %v672 = vunpack.c.l.b16 %v409
        %v673 = vunpack.c.h.b16 %v409
        %v674 = vunpack.c.l.b16 %v410
        %v675 = vunpack.c.h.b16 %v410
        %v676 = vunpack.c.l.b16 %v411
        %v677 = vunpack.c.h.b16 %v411
        %v678 = vunpack.c.l.b16 %v412
        %v679 = vunpack.c.h.b16 %v412
        %v680 = vunpack.c.l.b16 %v413
        %v681 = vunpack.c.h.b16 %v413
        %v682 = vunpack.c.l.b16 %v414
        %v683 = vunpack.c.h.b16 %v414
        %v684 = vunpack.c.l.b16 %v415
        %v685 = vunpack.c.h.b16 %v415
        %v686 = vunpack.c.l.b16 %v416
        %v687 = vunpack.c.h.b16 %v416
        %v688 = vunpack.c.l.b16 %v417
        %v689 = vunpack.c.h.b16 %v417
        %v690 = vunpack.c.l.b16 %v418
        %v691 = vunpack.c.h.b16 %v418
        %v692 = vunpack.c.l.b16 %v419
        %v693 = vunpack.c.h.b16 %v419
        %v694 = vunpack.c.l.b16 %v420
        %v695 = vunpack.c.h.b16 %v420
        %v696 = vunpack.c.l.b16 %v421
        %v697 = vunpack.c.h.b16 %v421
        %v698 = vunpack.c.l.b16 %v422
        %v699 = vunpack.c.h.b16 %v422
        %v700 = vunpack.c.l.b16 %v423
        %v701 = vunpack.c.h.b16 %v423
        %v702 = vunpack.c.l.b16 %v424
        %v703 = vunpack.c.h.b16 %v424
        %v704 = vunpack.c.l.b16 %v425
        %v705 = vunpack.c.h.b16 %v425
        %v706 = vunpack.c.l.b16 %v426
        %v707 = vunpack.c.h.b16 %v426
        %v708 = vunpack.c.l.b16 %v427
        %v709 = vunpack.c.h.b16 %v427
        %v710 = vunpack.c.l.b16 %v428
        %v711 = vunpack.c.h.b16 %v428
        %v712 = vunpack.c.l.b16 %v429
        %v713 = vunpack.c.h.b16 %v429
        %v714 = vunpack.c.l.b16 %v430
        %v715 = vunpack.c.h.b16 %v430
        %v716 = vunpack.c.l.b16 %v431
        %v717 = vunpack.c.h.b16 %v431
        %v718 = vunpack.c.l.b16 %v432
        %v719 = vunpack.c.h.b16 %v432
        %v720 = vunpack.c.l.b16 %v433
        %v721 = vunpack.c.h.b16 %v433
        %v722 = vunpack.c.l.b16 %v434
        %v723 = vunpack.c.h.b16 %v434
        %v724 = vunpack.c.l.b16 %v435
        %v725 = vunpack.c.h.b16 %v435
        %v726 = vunpack.c.l.b16 %v436
        %v727 = vunpack.c.h.b16 %v436
        %v728 = vunpack.c.l.b16 %v437
        %v729 = vunpack.c.h.b16 %v437
        %v730 = vunpack.c.l.b16 %v438
        %v731 = vunpack.c.h.b16 %v438
        %v732 = vunpack.c.l.b16 %v439
        %v733 = vunpack.c.h.b16 %v439
        %v734 = vunpack.c.l.b16 %v440
        %v735 = vunpack.c.h.b16 %v440
        %v736 = vunpack.c.l.b16 %v441
        %v737 = vunpack.c.h.b16 %v441
        %v738 = vunpack.c.l.b16 %v442
        %v739 = vunpack.c.h.b16 %v442
        %v740 = vunpack.c.l.b16 %v443
        %v741 = vunpack.c.h.b16 %v443
        %v742 = vunpack.c.l.b16 %v444
        %v743 = vunpack.c.h.b16 %v444
        %v744 = vunpack.c.l.b16 %v445
        %v745 = vunpack.c.h.b16 %v445
        %v746 = vunpack.c.l.b16 %v446
        %v747 = vunpack.c.h.b16 %v446
        %v748 = vunpack.c.l.b16 %v447
        %v749 = vunpack.c.h.b16 %v447
        %v750 = vunpack.c.l.b16 %v448
        %v751 = vunpack.c.h.b16 %v448
        %v752 = vunpack.c.l.b16 %v449
        %v753 = vunpack.c.h.b16 %v449
        %v754 = vpack.c.b16 %v606, %v602
        %v755 = vpack.c.b16 %v607, %v603
        %v756 = vpack.c.b16 %v608, %v604
        %v757 = vpack.c.b16 %v609, %v605
        %v758 = vpack.c.b16 %v614, %v610
        %v759 = vpack.c.b16 %v615, %v611
        %v760 = vpack.c.b16 %v616, %v612
        %v761 = vpack.c.b16 %v617, %v613
        %v762 = vpack.c.b16 %v622, %v618
        %v763 = vpack.c.b16 %v623, %v619
        %v764 = vpack.c.b16 %v624, %v620
        %v765 = vpack.c.b16 %v625, %v621
        %v766 = vpack.c.b16 %v630, %v626
        %v767 = vpack.c.b16 %v631, %v627
        %v768 = vpack.c.b16 %v632, %v628
        %v769 = vpack.c.b16 %v633, %v629
        %v770 = vpack.c.b16 %v638, %v634
        %v771 = vpack.c.b16 %v639, %v635
        %v772 = vpack.c.b16 %v640, %v636
        %v773 = vpack.c.b16 %v641, %v637
        %v774 = vpack.c.b16 %v646, %v642
        %v775 = vpack.c.b16 %v647, %v643
        %v776 = vpack.c.b16 %v648, %v644
        %v777 = vpack.c.b16 %v649, %v645
        %v778 = vpack.c.b16 %v654, %v650
        %v779 = vpack.c.b16 %v655, %v651
        %v780 = vpack.c.b16 %v656, %v652
        %v781 = vpack.c.b16 %v657, %v653
        %v782 = vpack.c.b16 %v662, %v658
        %v783 = vpack.c.b16 %v663, %v659
        %v784 = vpack.c.b16 %v664, %v660
        %v785 = vpack.c.b16 %v665, %v661
        %v786 = vpack.c.b16 %v670, %v666
        %v787 = vpack.c.b16 %v671, %v667
        %v788 = vpack.c.b16 %v672, %v668
        %v789 = vpack.c.b16 %v673, %v669
        %v790 = vpack.c.b16 %v678, %v674
        %v791 = vpack.c.b16 %v679, %v675
        %v792 = vpack.c.b16 %v680, %v676
        %v793 = vpack.c.b16 %v681, %v677
        %v794 = vpack.c.b16 %v686, %v682
        %v795 = vpack.c.b16 %v687, %v683
        %v796 = vpack.c.b16 %v688, %v684
        %v797 = vpack.c.b16 %v689, %v685
        %v798 = vpack.c.b16 %v694, %v690
        %v799 = vpack.c.b16 %v695, %v691
        %v800 = vpack.c.b16 %v696, %v692
        %v801 = vpack.c.b16 %v697, %v693
        %v802 = vpack.c.b16 %v702, %v698
        %v803 = vpack.c.b16 %v703, %v699
        %v804 = vpack.c.b16 %v704, %v700
        %v805 = vpack.c.b16 %v705, %v701
        %v806 = vpack.c.b16 %v710, %v706
        %v807 = vpack.c.b16 %v711, %v707
        %v808 = vpack.c.b16 %v712, %v708
        %v809 = vpack.c.b16 %v713, %v709
        %v810 = vpack.c.b16 %v718, %v714
        %v811 = vpack.c.b16 %v719, %v715
        %v812 = vpack.c.b16 %v720, %v716
        %v813 = vpack.c.b16 %v721, %v717
        %v814 = vpack.c.b16 %v726, %v722
        %v815 = vpack.c.b16 %v727, %v723
        %v816 = vpack.c.b16 %v728, %v724
        %v817 = vpack.c.b16 %v729, %v725
        %v818 = vpack.c.b16 %v734, %v730
        %v819 = vpack.c.b16 %v735, %v731
        %v820 = vpack.c.b16 %v736, %v732
        %v821 = vpack.c.b16 %v737, %v733
        %v822 = vpack.c.b16 %v742, %v738
        %v823 = vpack.c.b16 %v743, %v739
        %v824 = vpack.c.b16 %v744, %v740
        %v825 = vpack.c.b16 %v745, %v741
        %v826 = vpack.c.b16 %v750, %v746
        %v827 = vpack.c.b16 %v751, %v747
        %v828 = vpack.c.b16 %v752, %v748
        %v829 = vpack.c.b16 %v753, %v749
        %v970 = vunpack.c.l.b16 %v450
        %v971 = vunpack.c.h.b16 %v450
        %v972 = vunpack.c.l.b16 %v451
        %v973 = vunpack.c.h.b16 %v451
        %v974 = vunpack.c.l.b16 %v452
        %v975 = vunpack.c.h.b16 %v452
        %v976 = vunpack.c.l.b16 %v453
        %v977 = vunpack.c.h.b16 %v453
        %v978 = vunpack.c.l.b16 %v454
        %v979 = vunpack.c.h.b16 %v454
        %v980 = vunpack.c.l.b16 %v455
        %v981 = vunpack.c.h.b16 %v455
        %v982 = vunpack.c.l.b16 %v456
        %v983 = vunpack.c.h.b16 %v456
        %v984 = vunpack.c.l.b16 %v457
        %v985 = vunpack.c.h.b16 %v457
        %v986 = vunpack.c.l.b16 %v458
        %v987 = vunpack.c.h.b16 %v458
        %v988 = vunpack.c.l.b16 %v459
        %v989 = vunpack.c.h.b16 %v459
        %v990 = vunpack.c.l.b16 %v460
        %v991 = vunpack.c.h.b16 %v460
        %v992 = vunpack.c.l.b16 %v461
        %v993 = vunpack.c.h.b16 %v461
        %v994 = vunpack.c.l.b16 %v462
        %v995 = vunpack.c.h.b16 %v462
        %v996 = vunpack.c.l.b16 %v463
        %v997 = vunpack.c.h.b16 %v463
        %v998 = vunpack.c.l.b16 %v464
        %v999 = vunpack.c.h.b16 %v464
        %v1000 = vunpack.c.l.b16 %v465
        %v1001 = vunpack.c.h.b16 %v465
        %v1002 = vunpack.c.l.b16 %v466
        %v1003 = vunpack.c.h.b16 %v466
        %v1004 = vunpack.c.l.b16 %v467
        %v1005 = vunpack.c.h.b16 %v467
        %v1006 = vunpack.c.l.b16 %v468
        %v1007 = vunpack.c.h.b16 %v468
        %v1008 = vunpack.c.l.b16 %v469
        %v1009 = vunpack.c.h.b16 %v469
        %v1010 = vunpack.c.l.b16 %v470
        %v1011 = vunpack.c.h.b16 %v470
        %v1012 = vunpack.c.l.b16 %v471
        %v1013 = vunpack.c.h.b16 %v471
        %v1014 = vunpack.c.l.b16 %v472
        %v1015 = vunpack.c.h.b16 %v472
        %v1016 = vunpack.c.l.b16 %v473
        %v1017 = vunpack.c.h.b16 %v473
        %v1018 = vunpack.c.l.b16 %v474
        %v1019 = vunpack.c.h.b16 %v474
        %v1020 = vunpack.c.l.b16 %v475
        %v1021 = vunpack.c.h.b16 %v475
        %v1022 = vunpack.c.l.b16 %v476
        %v1023 = vunpack.c.h.b16 %v476
        %v1024 = vunpack.c.l.b16 %v477
        %v1025 = vunpack.c.h.b16 %v477
        %v1026 = vunpack.c.l.b16 %v478
        %v1027 = vunpack.c.h.b16 %v478
        %v1028 = vunpack.c.l.b16 %v479
        %v1029 = vunpack.c.h.b16 %v479
        %v1030 = vunpack.c.l.b16 %v480
        %v1031 = vunpack.c.h.b16 %v480
        %v1032 = vunpack.c.l.b16 %v481
        %v1033 = vunpack.c.h.b16 %v481
        %v1034 = vunpack.c.l.b16 %v482
        %v1035 = vunpack.c.h.b16 %v482
        %v1036 = vunpack.c.l.b16 %v483
        %v1037 = vunpack.c.h.b16 %v483
        %v1038 = vunpack.c.l.b16 %v484
        %v1039 = vunpack.c.h.b16 %v484
        %v1040 = vunpack.c.l.b16 %v485
        %v1041 = vunpack.c.h.b16 %v485
        %v1042 = vunpack.c.l.b16 %v486
        %v1043 = vunpack.c.h.b16 %v486
        %v1044 = vunpack.c.l.b16 %v487
        %v1045 = vunpack.c.h.b16 %v487
        %v1046 = vunpack.c.l.b16 %v488
        %v1047 = vunpack.c.h.b16 %v488
        %v1048 = vunpack.c.l.b16 %v489
        %v1049 = vunpack.c.h.b16 %v489
        %v1050 = vunpack.c.l.b16 %v490
        %v1051 = vunpack.c.h.b16 %v490
        %v1052 = vunpack.c.l.b16 %v491
        %v1053 = vunpack.c.h.b16 %v491
        %v1054 = vunpack.c.l.b16 %v492
        %v1055 = vunpack.c.h.b16 %v492
        %v1056 = vunpack.c.l.b16 %v493
        %v1057 = vunpack.c.h.b16 %v493
        %v1058 = vunpack.c.l.b16 %v494
        %v1059 = vunpack.c.h.b16 %v494
        %v1060 = vunpack.c.l.b16 %v495
        %v1061 = vunpack.c.h.b16 %v495
        %v1062 = vunpack.c.l.b16 %v496
        %v1063 = vunpack.c.h.b16 %v496
        %v1064 = vunpack.c.l.b16 %v497
        %v1065 = vunpack.c.h.b16 %v497
        %v1066 = vunpack.c.l.b16 %v498
        %v1067 = vunpack.c.h.b16 %v498
        %v1068 = vunpack.c.l.b16 %v499
        %v1069 = vunpack.c.h.b16 %v499
        %v1070 = vunpack.c.l.b16 %v500
        %v1071 = vunpack.c.h.b16 %v500
        %v1072 = vunpack.c.l.b16 %v501
        %v1073 = vunpack.c.h.b16 %v501
        %v1074 = vunpack.c.l.b16 %v502
        %v1075 = vunpack.c.h.b16 %v502
        %v1076 = vunpack.c.l.b16 %v503
        %v1077 = vunpack.c.h.b16 %v503
        %v1078 = vunpack.c.l.b16 %v504
        %v1079 = vunpack.c.h.b16 %v504
        %v1080 = vunpack.c.l.b16 %v505
        %v1081 = vunpack.c.h.b16 %v505
        %v1082 = vunpack.c.l.b16 %v506
        %v1083 = vunpack.c.h.b16 %v506
        %v1084 = vunpack.c.l.b16 %v507
        %v1085 = vunpack.c.h.b16 %v507
        %v1086 = vunpack.c.l.b16 %v508
        %v1087 = vunpack.c.h.b16 %v508
        %v1088 = vunpack.c.l.b16 %v509
        %v1089 = vunpack.c.h.b16 %v509
        %v1090 = vunpack.c.l.b16 %v510
        %v1091 = vunpack.c.h.b16 %v510
        %v1092 = vunpack.c.l.b16 %v511
        %v1093 = vunpack.c.h.b16 %v511
        %v1094 = vunpack.c.l.b16 %v512
        %v1095 = vunpack.c.h.b16 %v512
        %v1096 = vunpack.c.l.b16 %v513
        %v1097 = vunpack.c.h.b16 %v513
        %v1098 = vpack.c.b16 %v972, %v970
        %v1099 = vpack.c.b16 %v973, %v971
        %v1100 = vpack.c.b16 %v976, %v974
        %v1101 = vpack.c.b16 %v977, %v975
        %v1102 = vpack.c.b16 %v980, %v978
        %v1103 = vpack.c.b16 %v981, %v979
        %v1104 = vpack.c.b16 %v984, %v982
        %v1105 = vpack.c.b16 %v985, %v983
        %v1106 = vpack.c.b16 %v988, %v986
        %v1107 = vpack.c.b16 %v989, %v987
        %v1108 = vpack.c.b16 %v992, %v990
        %v1109 = vpack.c.b16 %v993, %v991
        %v1110 = vpack.c.b16 %v996, %v994
        %v1111 = vpack.c.b16 %v997, %v995
        %v1112 = vpack.c.b16 %v1000, %v998
        %v1113 = vpack.c.b16 %v1001, %v999
        %v1114 = vpack.c.b16 %v1004, %v1002
        %v1115 = vpack.c.b16 %v1005, %v1003
        %v1116 = vpack.c.b16 %v1008, %v1006
        %v1117 = vpack.c.b16 %v1009, %v1007
        %v1118 = vpack.c.b16 %v1012, %v1010
        %v1119 = vpack.c.b16 %v1013, %v1011
        %v1120 = vpack.c.b16 %v1016, %v1014
        %v1121 = vpack.c.b16 %v1017, %v1015
        %v1122 = vpack.c.b16 %v1020, %v1018
        %v1123 = vpack.c.b16 %v1021, %v1019
        %v1124 = vpack.c.b16 %v1024, %v1022
        %v1125 = vpack.c.b16 %v1025, %v1023
        %v1126 = vpack.c.b16 %v1028, %v1026
        %v1127 = vpack.c.b16 %v1029, %v1027
        %v1128 = vpack.c.b16 %v1032, %v1030
        %v1129 = vpack.c.b16 %v1033, %v1031
        %v1130 = vpack.c.b16 %v1036, %v1034
        %v1131 = vpack.c.b16 %v1037, %v1035
        %v1132 = vpack.c.b16 %v1040, %v1038
        %v1133 = vpack.c.b16 %v1041, %v1039
        %v1134 = vpack.c.b16 %v1044, %v1042
        %v1135 = vpack.c.b16 %v1045, %v1043
        %v1136 = vpack.c.b16 %v1048, %v1046
        %v1137 = vpack.c.b16 %v1049, %v1047
        %v1138 = vpack.c.b16 %v1052, %v1050
        %v1139 = vpack.c.b16 %v1053, %v1051
        %v1140 = vpack.c.b16 %v1056, %v1054
        %v1141 = vpack.c.b16 %v1057, %v1055
        %v1142 = vpack.c.b16 %v1060, %v1058
        %v1143 = vpack.c.b16 %v1061, %v1059
        %v1144 = vpack.c.b16 %v1064, %v1062
        %v1145 = vpack.c.b16 %v1065, %v1063
        %v1146 = vpack.c.b16 %v1068, %v1066
        %v1147 = vpack.c.b16 %v1069, %v1067
        %v1148 = vpack.c.b16 %v1072, %v1070
        %v1149 = vpack.c.b16 %v1073, %v1071
        %v1150 = vpack.c.b16 %v1076, %v1074
        %v1151 = vpack.c.b16 %v1077, %v1075
        %v1152 = vpack.c.b16 %v1080, %v1078
        %v1153 = vpack.c.b16 %v1081, %v1079
        %v1154 = vpack.c.b16 %v1084, %v1082
        %v1155 = vpack.c.b16 %v1085, %v1083
        %v1156 = vpack.c.b16 %v1088, %v1086
        %v1157 = vpack.c.b16 %v1089, %v1087
        %v1158 = vpack.c.b16 %v1092, %v1090
        %v1159 = vpack.c.b16 %v1093, %v1091
        %v1160 = vpack.c.b16 %v1096, %v1094
        %v1161 = vpack.c.b16 %v1097, %v1095
        %1226 = vmatprep.subr.bf16.mxu0 %v1099
        %1227 = vmatpush1.bf16.msra.mxu0 %v1098
        %1228 = vmatprep.subr.bf16.mxu0 %v1101
        %1229 = vmatpush1.bf16.msra.mxu0 %v1100
        %1230 = vmatprep.subr.bf16.mxu0 %v1103
        %1231 = vmatpush1.bf16.msra.mxu0 %v1102
        %1232 = vmatprep.subr.bf16.mxu0 %v1105
        %1233 = vmatpush1.bf16.msra.mxu0 %v1104
        %1234 = vmatprep.subr.bf16.mxu0 %v1107
        %1235 = vmatpush1.bf16.msra.mxu0 %v1106
        %1236 = vmatprep.subr.bf16.mxu0 %v1109
        %1237 = vmatpush1.bf16.msra.mxu0 %v1108
        %1238 = vmatprep.subr.bf16.mxu0 %v1111
        %1239 = vmatpush1.bf16.msra.mxu0 %v1110
        %1240 = vmatprep.subr.bf16.mxu0 %v1113
        %1241 = vmatpush1.bf16.msra.mxu0 %v1112
        %1242 = vmatprep.subr.bf16.mxu0 %v1115
        %1243 = vmatpush1.bf16.msra.mxu0 %v1114
        %1244 = vmatprep.subr.bf16.mxu0 %v1117
        %1245 = vmatpush1.bf16.msra.mxu0 %v1116
        %1246 = vmatprep.subr.bf16.mxu0 %v1119
        %1247 = vmatpush1.bf16.msra.mxu0 %v1118
        %1248 = vmatprep.subr.bf16.mxu0 %v1121
        %1249 = vmatpush1.bf16.msra.mxu0 %v1120
        %1250 = vmatprep.subr.bf16.mxu0 %v1123
        %1251 = vmatpush1.bf16.msra.mxu0 %v1122
        %1252 = vmatprep.subr.bf16.mxu0 %v1125
        %1253 = vmatpush1.bf16.msra.mxu0 %v1124
        %1254 = vmatprep.subr.bf16.mxu0 %v1127
        %1255 = vmatpush1.bf16.msra.mxu0 %v1126
        %1256 = vmatprep.subr.bf16.mxu0 %v1129
        %1257 = vmatpush1.bf16.msra.mxu0 %v1128
        %1258 = vmatprep.mubr.bf16.mxu0 %v755
        %1259 = vmatmul.mubr.bf16.gmra.mrb[0].mxu0 %v754
        %v1260 = vpop.f32.mrb[0].mxu0
        %v1261 = vadd.f32 %v519, %v1260
        %v1262 = vpop.f32.mrb[0].mxu0
        %v1263 = vadd.f32 %v523, %v1262
        %v1264 = vpop.f32.mrb[0].mxu0
        %v1265 = vadd.f32 %v519, %v1264
        %v1266 = vpop.f32.mrb[0].mxu0
        %v1267 = vadd.f32 %v523, %v1266
        %1268 = vmatprep.mubr.bf16.mxu0 %v759
        %1269 = vmatmul.mubr.bf16.gmra.mrb[0].mxu0 %v758
        %v1270 = vpop.f32.mrb[0].mxu0
        %v1271 = vadd.f32 %v519, %v1270
        %v1272 = vpop.f32.mrb[0].mxu0
        %v1273 = vadd.f32 %v523, %v1272
        %v1274 = vpop.f32.mrb[0].mxu0
        %v1275 = vadd.f32 %v519, %v1274
        %v1276 = vpop.f32.mrb[0].mxu0
        %v1277 = vadd.f32 %v523, %v1276
        %1278 = vmatprep.mubr.bf16.mxu0 %v763
        %1279 = vmatmul.mubr.bf16.gmra.mrb[0].mxu0 %v762
        %v1280 = vpop.f32.mrb[0].mxu0
        %v1281 = vadd.f32 %v519, %v1280
        %v1282 = vpop.f32.mrb[0].mxu0
        %v1283 = vadd.f32 %v523, %v1282
        %v1284 = vpop.f32.mrb[0].mxu0
        %v1285 = vadd.f32 %v519, %v1284
        %v1286 = vpop.f32.mrb[0].mxu0
        %v1287 = vadd.f32 %v523, %v1286
        %1288 = vmatprep.mubr.bf16.mxu0 %v767
        %1289 = vmatmul.mubr.bf16.gmra.mrb[0].mxu0 %v766
        %v1290 = vpop.f32.mrb[0].mxu0
        %v1291 = vadd.f32 %v519, %v1290
        %v1292 = vpop.f32.mrb[0].mxu0
        %v1293 = vadd.f32 %v523, %v1292
        %v1294 = vpop.f32.mrb[0].mxu0
        %v1295 = vadd.f32 %v519, %v1294
        %v1296 = vpop.f32.mrb[0].mxu0
        %v1297 = vadd.f32 %v523, %v1296
        %1298 = vmatprep.mubr.bf16.mxu0 %v771
        %1299 = vmatmul.mubr.bf16.gmra.mrb[0].mxu0 %v770
        %v1300 = vpop.f32.mrb[0].mxu0
        %v1301 = vadd.f32 %v519, %v1300
        %v1302 = vpop.f32.mrb[0].mxu0
        %v1303 = vadd.f32 %v523, %v1302
        %v1304 = vpop.f32.mrb[0].mxu0
        %v1305 = vadd.f32 %v519, %v1304
        %v1306 = vpop.f32.mrb[0].mxu0
        %v1307 = vadd.f32 %v523, %v1306
        %1308 = vmatprep.mubr.bf16.mxu0 %v775
        %1309 = vmatmul.mubr.bf16.gmra.mrb[0].mxu0 %v774
        %v1310 = vpop.f32.mrb[0].mxu0
        %v1311 = vadd.f32 %v519, %v1310
        %v1312 = vpop.f32.mrb[0].mxu0
        %v1313 = vadd.f32 %v523, %v1312
        %v1314 = vpop.f32.mrb[0].mxu0
        %v1315 = vadd.f32 %v519, %v1314
        %v1316 = vpop.f32.mrb[0].mxu0
        %v1317 = vadd.f32 %v523, %v1316
        %1318 = vmatprep.mubr.bf16.mxu0 %v779
        %1319 = vmatmul.mubr.bf16.gmra.mrb[0].mxu0 %v778
        %v1320 = vpop.f32.mrb[0].mxu0
        %v1321 = vadd.f32 %v519, %v1320
        %v1322 = vpop.f32.mrb[0].mxu0
        %v1323 = vadd.f32 %v523, %v1322
        %v1324 = vpop.f32.mrb[0].mxu0
        %v1325 = vadd.f32 %v519, %v1324
        %v1326 = vpop.f32.mrb[0].mxu0
        %v1327 = vadd.f32 %v523, %v1326
        %1328 = vmatprep.mubr.bf16.mxu0 %v783
        %1329 = vmatmul.mubr.bf16.gmra.mrb[0].mxu0 %v782
        %v1330 = vpop.f32.mrb[0].mxu0
        %v1331 = vadd.f32 %v519, %v1330
        %v1332 = vpop.f32.mrb[0].mxu0
        %v1333 = vadd.f32 %v523, %v1332
        %v1334 = vpop.f32.mrb[0].mxu0
        %v1335 = vadd.f32 %v519, %v1334
        %v1336 = vpop.f32.mrb[0].mxu0
        %v1337 = vadd.f32 %v523, %v1336
        %1338 = vmatprep.mubr.bf16.mxu0 %v787
        %1339 = vmatmul.mubr.bf16.gmra.mrb[0].mxu0 %v786
        %v1340 = vpop.f32.mrb[0].mxu0
        %v1341 = vadd.f32 %v519, %v1340
        %v1342 = vpop.f32.mrb[0].mxu0
        %v1343 = vadd.f32 %v523, %v1342
        %v1344 = vpop.f32.mrb[0].mxu0
        %v1345 = vadd.f32 %v519, %v1344
        %v1346 = vpop.f32.mrb[0].mxu0
        %v1347 = vadd.f32 %v523, %v1346
        %1348 = vmatprep.mubr.bf16.mxu0 %v791
        %1349 = vmatmul.mubr.bf16.gmra.mrb[0].mxu0 %v790
        %v1350 = vpop.f32.mrb[0].mxu0
        %v1351 = vadd.f32 %v519, %v1350
        %v1352 = vpop.f32.mrb[0].mxu0
        %v1353 = vadd.f32 %v523, %v1352
        %v1354 = vpop.f32.mrb[0].mxu0
        %v1355 = vadd.f32 %v519, %v1354
        %v1356 = vpop.f32.mrb[0].mxu0
        %v1357 = vadd.f32 %v523, %v1356
        %1358 = vmatprep.mubr.bf16.mxu0 %v795
        %1359 = vmatmul.mubr.bf16.gmra.mrb[0].mxu0 %v794
        %v1360 = vpop.f32.mrb[0].mxu0
        %v1361 = vadd.f32 %v519, %v1360
        %v1362 = vpop.f32.mrb[0].mxu0
        %v1363 = vadd.f32 %v523, %v1362
        %v1364 = vpop.f32.mrb[0].mxu0
        %v1365 = vadd.f32 %v519, %v1364
        %v1366 = vpop.f32.mrb[0].mxu0
        %v1367 = vadd.f32 %v523, %v1366
        %1368 = vmatprep.mubr.bf16.mxu0 %v799
        %1369 = vmatmul.mubr.bf16.gmra.mrb[0].mxu0 %v798
        %v1370 = vpop.f32.mrb[0].mxu0
        %v1371 = vadd.f32 %v519, %v1370
        %v1372 = vpop.f32.mrb[0].mxu0
        %v1373 = vadd.f32 %v523, %v1372
        %v1374 = vpop.f32.mrb[0].mxu0
        %v1375 = vadd.f32 %v519, %v1374
        %v1376 = vpop.f32.mrb[0].mxu0
        %v1377 = vadd.f32 %v523, %v1376
        %1378 = vmatprep.mubr.bf16.mxu0 %v803
        %1379 = vmatmul.mubr.bf16.gmra.mrb[0].mxu0 %v802
        %v1380 = vpop.f32.mrb[0].mxu0
        %v1381 = vadd.f32 %v519, %v1380
        %v1382 = vpop.f32.mrb[0].mxu0
        %v1383 = vadd.f32 %v523, %v1382
        %v1384 = vpop.f32.mrb[0].mxu0
        %v1385 = vadd.f32 %v519, %v1384
        %v1386 = vpop.f32.mrb[0].mxu0
        %v1387 = vadd.f32 %v523, %v1386
        %1388 = vmatprep.mubr.bf16.mxu0 %v807
        %1389 = vmatmul.mubr.bf16.gmra.mrb[0].mxu0 %v806
        %v1390 = vpop.f32.mrb[0].mxu0
        %v1391 = vadd.f32 %v519, %v1390
        %v1392 = vpop.f32.mrb[0].mxu0
        %v1393 = vadd.f32 %v523, %v1392
        %v1394 = vpop.f32.mrb[0].mxu0
        %v1395 = vadd.f32 %v519, %v1394
        %v1396 = vpop.f32.mrb[0].mxu0
        %v1397 = vadd.f32 %v523, %v1396
        %1398 = vmatprep.mubr.bf16.mxu0 %v811
        %1399 = vmatmul.mubr.bf16.gmra.mrb[0].mxu0 %v810
        %v1400 = vpop.f32.mrb[0].mxu0
        %v1401 = vadd.f32 %v519, %v1400
        %v1402 = vpop.f32.mrb[0].mxu0
        %v1403 = vadd.f32 %v523, %v1402
        %v1404 = vpop.f32.mrb[0].mxu0
        %v1405 = vadd.f32 %v519, %v1404
        %v1406 = vpop.f32.mrb[0].mxu0
        %v1407 = vadd.f32 %v523, %v1406
        %1408 = vmatprep.mubr.bf16.mxu0 %v815
        %1409 = vmatmul.mubr.bf16.gmra.mrb[0].mxu0 %v814
        %v1410 = vpop.f32.mrb[0].mxu0
        %v1411 = vadd.f32 %v519, %v1410
        %v1412 = vpop.f32.mrb[0].mxu0
        %v1413 = vadd.f32 %v523, %v1412
        %v1414 = vpop.f32.mrb[0].mxu0
        %v1415 = vadd.f32 %v519, %v1414
        %v1416 = vpop.f32.mrb[0].mxu0
        %v1417 = vadd.f32 %v523, %v1416
        %1418 = vmatprep.mubr.bf16.mxu0 %v819
        %1419 = vmatmul.mubr.bf16.gmra.mrb[0].mxu0 %v818
        %v1420 = vpop.f32.mrb[0].mxu0
        %v1421 = vadd.f32 %v519, %v1420
        %v1422 = vpop.f32.mrb[0].mxu0
        %v1423 = vadd.f32 %v523, %v1422
        %v1424 = vpop.f32.mrb[0].mxu0
        %v1425 = vadd.f32 %v519, %v1424
        %v1426 = vpop.f32.mrb[0].mxu0
        %v1427 = vadd.f32 %v523, %v1426
        %1428 = vmatprep.mubr.bf16.mxu0 %v823
        %1429 = vmatmul.mubr.bf16.gmra.mrb[0].mxu0 %v822
        %v1430 = vpop.f32.mrb[0].mxu0
        %v1431 = vadd.f32 %v519, %v1430
        %v1432 = vpop.f32.mrb[0].mxu0
        %v1433 = vadd.f32 %v523, %v1432
        %v1434 = vpop.f32.mrb[0].mxu0
        %v1435 = vadd.f32 %v519, %v1434
        %v1436 = vpop.f32.mrb[0].mxu0
        %v1437 = vadd.f32 %v523, %v1436
        %1438 = vmatprep.mubr.bf16.mxu0 %v827
        %1439 = vmatmul.mubr.bf16.gmra.mrb[0].mxu0 %v826
        %v1440 = vpop.f32.mrb[0].mxu0
        %v1441 = vadd.f32 %v519, %v1440
        %v1442 = vpop.f32.mrb[0].mxu0
        %v1443 = vadd.f32 %v523, %v1442
        %v1444 = vpop.f32.mrb[0].mxu0
        %v1445 = vadd.f32 %v519, %v1444
        %v1446 = vpop.f32.mrb[0].mxu0
        %v1447 = vadd.f32 %v523, %v1446
        %1448 = vdwg.mxu0
        %1449 = vmatprep.subr.bf16.mxu0 %v1131
        %1450 = vmatpush1.bf16.msra.mxu0 %v1130
        %1451 = vmatprep.subr.bf16.mxu0 %v1133
        %1452 = vmatpush1.bf16.msra.mxu0 %v1132
        %1453 = vmatprep.subr.bf16.mxu0 %v1135
        %1454 = vmatpush1.bf16.msra.mxu0 %v1134
        %1455 = vmatprep.subr.bf16.mxu0 %v1137
        %1456 = vmatpush1.bf16.msra.mxu0 %v1136
        %1457 = vmatprep.subr.bf16.mxu0 %v1139
        %1458 = vmatpush1.bf16.msra.mxu0 %v1138
        %1459 = vmatprep.subr.bf16.mxu0 %v1141
        %1460 = vmatpush1.bf16.msra.mxu0 %v1140
        %1461 = vmatprep.subr.bf16.mxu0 %v1143
        %1462 = vmatpush1.bf16.msra.mxu0 %v1142
        %1463 = vmatprep.subr.bf16.mxu0 %v1145
        %1464 = vmatpush1.bf16.msra.mxu0 %v1144
        %1465 = vmatprep.subr.bf16.mxu0 %v1147
        %1466 = vmatpush1.bf16.msra.mxu0 %v1146
        %1467 = vmatprep.subr.bf16.mxu0 %v1149
        %1468 = vmatpush1.bf16.msra.mxu0 %v1148
        %1469 = vmatprep.subr.bf16.mxu0 %v1151
        %1470 = vmatpush1.bf16.msra.mxu0 %v1150
        %1471 = vmatprep.subr.bf16.mxu0 %v1153
        %1472 = vmatpush1.bf16.msra.mxu0 %v1152
        %1473 = vmatprep.subr.bf16.mxu0 %v1155
        %1474 = vmatpush1.bf16.msra.mxu0 %v1154
        %1475 = vmatprep.subr.bf16.mxu0 %v1157
        %1476 = vmatpush1.bf16.msra.mxu0 %v1156
        %1477 = vmatprep.subr.bf16.mxu0 %v1159
        %1478 = vmatpush1.bf16.msra.mxu0 %v1158
        %1479 = vmatprep.subr.bf16.mxu0 %v1161
        %1480 = vmatpush1.bf16.msra.mxu0 %v1160
        %1481 = vmatprep.mubr.bf16.mxu0 %v757
        %1482 = vmatmul.mubr.bf16.gmra.mrb[0].mxu0 %v756
        %v1483 = vpop.f32.mrb[0].mxu0
        %v1484 = vadd.f32 %v1261, %v1483
        %v1485 = vpop.f32.mrb[0].mxu0
        %v1486 = vadd.f32 %v1263, %v1485
        %v1487 = vpop.f32.mrb[0].mxu0
        %v1488 = vadd.f32 %v1265, %v1487
        %v1489 = vpop.f32.mrb[0].mxu0
        %v1490 = vadd.f32 %v1267, %v1489
        %1491 = vmatprep.mubr.bf16.mxu0 %v761
        %1492 = vmatmul.mubr.bf16.gmra.mrb[0].mxu0 %v760
        %v1493 = vpop.f32.mrb[0].mxu0
        %v1494 = vadd.f32 %v1271, %v1493
        %v1495 = vpop.f32.mrb[0].mxu0
        %v1496 = vadd.f32 %v1273, %v1495
        %v1497 = vpop.f32.mrb[0].mxu0
        %v1498 = vadd.f32 %v1275, %v1497
        %v1499 = vpop.f32.mrb[0].mxu0
        %v1500 = vadd.f32 %v1277, %v1499
        %1501 = vmatprep.mubr.bf16.mxu0 %v765
        %1502 = vmatmul.mubr.bf16.gmra.mrb[0].mxu0 %v764
        %v1503 = vpop.f32.mrb[0].mxu0
        %v1504 = vadd.f32 %v1281, %v1503
        %v1505 = vpop.f32.mrb[0].mxu0
        %v1506 = vadd.f32 %v1283, %v1505
        %v1507 = vpop.f32.mrb[0].mxu0
        %v1508 = vadd.f32 %v1285, %v1507
        %v1509 = vpop.f32.mrb[0].mxu0
        %v1510 = vadd.f32 %v1287, %v1509
        %1511 = vmatprep.mubr.bf16.mxu0 %v769
        %1512 = vmatmul.mubr.bf16.gmra.mrb[0].mxu0 %v768
        %v1513 = vpop.f32.mrb[0].mxu0
        %v1514 = vadd.f32 %v1291, %v1513
        %v1515 = vpop.f32.mrb[0].mxu0
        %v1516 = vadd.f32 %v1293, %v1515
        %v1517 = vpop.f32.mrb[0].mxu0
        %v1518 = vadd.f32 %v1295, %v1517
        %v1519 = vpop.f32.mrb[0].mxu0
        %v1520 = vadd.f32 %v1297, %v1519
        %1521 = vmatprep.mubr.bf16.mxu0 %v773
        %1522 = vmatmul.mubr.bf16.gmra.mrb[0].mxu0 %v772
        %v1523 = vpop.f32.mrb[0].mxu0
        %v1524 = vadd.f32 %v1301, %v1523
        %v1525 = vpop.f32.mrb[0].mxu0
        %v1526 = vadd.f32 %v1303, %v1525
        %v1527 = vpop.f32.mrb[0].mxu0
        %v1528 = vadd.f32 %v1305, %v1527
        %v1529 = vpop.f32.mrb[0].mxu0
        %v1530 = vadd.f32 %v1307, %v1529
        %1531 = vmatprep.mubr.bf16.mxu0 %v777
        %1532 = vmatmul.mubr.bf16.gmra.mrb[0].mxu0 %v776
        %v1533 = vpop.f32.mrb[0].mxu0
        %v1534 = vadd.f32 %v1311, %v1533
        %v1535 = vpop.f32.mrb[0].mxu0
        %v1536 = vadd.f32 %v1313, %v1535
        %v1537 = vpop.f32.mrb[0].mxu0
        %v1538 = vadd.f32 %v1315, %v1537
        %v1539 = vpop.f32.mrb[0].mxu0
        %v1540 = vadd.f32 %v1317, %v1539
        %1541 = vmatprep.mubr.bf16.mxu0 %v781
        %1542 = vmatmul.mubr.bf16.gmra.mrb[0].mxu0 %v780
        %v1543 = vpop.f32.mrb[0].mxu0
        %v1544 = vadd.f32 %v1321, %v1543
        %v1545 = vpop.f32.mrb[0].mxu0
        %v1546 = vadd.f32 %v1323, %v1545
        %v1547 = vpop.f32.mrb[0].mxu0
        %v1548 = vadd.f32 %v1325, %v1547
        %v1549 = vpop.f32.mrb[0].mxu0
        %v1550 = vadd.f32 %v1327, %v1549
        %1551 = vmatprep.mubr.bf16.mxu0 %v785
        %1552 = vmatmul.mubr.bf16.gmra.mrb[0].mxu0 %v784
        %v1553 = vpop.f32.mrb[0].mxu0
        %v1554 = vadd.f32 %v1331, %v1553
        %v1555 = vpop.f32.mrb[0].mxu0
        %v1556 = vadd.f32 %v1333, %v1555
        %v1557 = vpop.f32.mrb[0].mxu0
        %v1558 = vadd.f32 %v1335, %v1557
        %v1559 = vpop.f32.mrb[0].mxu0
        %v1560 = vadd.f32 %v1337, %v1559
        %1561 = vmatprep.mubr.bf16.mxu0 %v789
        %1562 = vmatmul.mubr.bf16.gmra.mrb[0].mxu0 %v788
        %v1563 = vpop.f32.mrb[0].mxu0
        %v1564 = vadd.f32 %v1341, %v1563
        %v1565 = vpop.f32.mrb[0].mxu0
        %v1566 = vadd.f32 %v1343, %v1565
        %v1567 = vpop.f32.mrb[0].mxu0
        %v1568 = vadd.f32 %v1345, %v1567
        %v1569 = vpop.f32.mrb[0].mxu0
        %v1570 = vadd.f32 %v1347, %v1569
        %1571 = vmatprep.mubr.bf16.mxu0 %v793
        %1572 = vmatmul.mubr.bf16.gmra.mrb[0].mxu0 %v792
        %v1573 = vpop.f32.mrb[0].mxu0
        %v1574 = vadd.f32 %v1351, %v1573
        %v1575 = vpop.f32.mrb[0].mxu0
        %v1576 = vadd.f32 %v1353, %v1575
        %v1577 = vpop.f32.mrb[0].mxu0
        %v1578 = vadd.f32 %v1355, %v1577
        %v1579 = vpop.f32.mrb[0].mxu0
        %v1580 = vadd.f32 %v1357, %v1579
        %1581 = vmatprep.mubr.bf16.mxu0 %v797
        %1582 = vmatmul.mubr.bf16.gmra.mrb[0].mxu0 %v796
        %v1583 = vpop.f32.mrb[0].mxu0
        %v1584 = vadd.f32 %v1361, %v1583
        %v1585 = vpop.f32.mrb[0].mxu0
        %v1586 = vadd.f32 %v1363, %v1585
        %v1587 = vpop.f32.mrb[0].mxu0
        %v1588 = vadd.f32 %v1365, %v1587
        %v1589 = vpop.f32.mrb[0].mxu0
        %v1590 = vadd.f32 %v1367, %v1589
        %1591 = vmatprep.mubr.bf16.mxu0 %v801
        %1592 = vmatmul.mubr.bf16.gmra.mrb[0].mxu0 %v800
        %v1593 = vpop.f32.mrb[0].mxu0
        %v1594 = vadd.f32 %v1371, %v1593
        %v1595 = vpop.f32.mrb[0].mxu0
        %v1596 = vadd.f32 %v1373, %v1595
        %v1597 = vpop.f32.mrb[0].mxu0
        %v1598 = vadd.f32 %v1375, %v1597
        %v1599 = vpop.f32.mrb[0].mxu0
        %v1600 = vadd.f32 %v1377, %v1599
        %1601 = vmatprep.mubr.bf16.mxu0 %v805
        %1602 = vmatmul.mubr.bf16.gmra.mrb[0].mxu0 %v804
        %v1603 = vpop.f32.mrb[0].mxu0
        %v1604 = vadd.f32 %v1381, %v1603
        %v1605 = vpop.f32.mrb[0].mxu0
        %v1606 = vadd.f32 %v1383, %v1605
        %v1607 = vpop.f32.mrb[0].mxu0
        %v1608 = vadd.f32 %v1385, %v1607
        %v1609 = vpop.f32.mrb[0].mxu0
        %v1610 = vadd.f32 %v1387, %v1609
        %1611 = vmatprep.mubr.bf16.mxu0 %v809
        %1612 = vmatmul.mubr.bf16.gmra.mrb[0].mxu0 %v808
        %v1613 = vpop.f32.mrb[0].mxu0
        %v1614 = vadd.f32 %v1391, %v1613
        %v1615 = vpop.f32.mrb[0].mxu0
        %v1616 = vadd.f32 %v1393, %v1615
        %v1617 = vpop.f32.mrb[0].mxu0
        %v1618 = vadd.f32 %v1395, %v1617
        %v1619 = vpop.f32.mrb[0].mxu0
        %v1620 = vadd.f32 %v1397, %v1619
        %1621 = vmatprep.mubr.bf16.mxu0 %v813
        %1622 = vmatmul.mubr.bf16.gmra.mrb[0].mxu0 %v812
        %v1623 = vpop.f32.mrb[0].mxu0
        %v1624 = vadd.f32 %v1401, %v1623
        %v1625 = vpop.f32.mrb[0].mxu0
        %v1626 = vadd.f32 %v1403, %v1625
        %v1627 = vpop.f32.mrb[0].mxu0
        %v1628 = vadd.f32 %v1405, %v1627
        %v1629 = vpop.f32.mrb[0].mxu0
        %v1630 = vadd.f32 %v1407, %v1629
        %1631 = vmatprep.mubr.bf16.mxu0 %v817
        %1632 = vmatmul.mubr.bf16.gmra.mrb[0].mxu0 %v816
        %v1633 = vpop.f32.mrb[0].mxu0
        %v1634 = vadd.f32 %v1411, %v1633
        %v1635 = vpop.f32.mrb[0].mxu0
        %v1636 = vadd.f32 %v1413, %v1635
        %v1637 = vpop.f32.mrb[0].mxu0
        %v1638 = vadd.f32 %v1415, %v1637
        %v1639 = vpop.f32.mrb[0].mxu0
        %v1640 = vadd.f32 %v1417, %v1639
        %1641 = vmatprep.mubr.bf16.mxu0 %v821
        %1642 = vmatmul.mubr.bf16.gmra.mrb[0].mxu0 %v820
        %v1643 = vpop.f32.mrb[0].mxu0
        %v1644 = vadd.f32 %v1421, %v1643
        %v1645 = vpop.f32.mrb[0].mxu0
        %v1646 = vadd.f32 %v1423, %v1645
        %v1647 = vpop.f32.mrb[0].mxu0
        %v1648 = vadd.f32 %v1425, %v1647
        %v1649 = vpop.f32.mrb[0].mxu0
        %v1650 = vadd.f32 %v1427, %v1649
        %1651 = vmatprep.mubr.bf16.mxu0 %v825
        %1652 = vmatmul.mubr.bf16.gmra.mrb[0].mxu0 %v824
        %v1653 = vpop.f32.mrb[0].mxu0
        %v1654 = vadd.f32 %v1431, %v1653
        %v1655 = vpop.f32.mrb[0].mxu0
        %v1656 = vadd.f32 %v1433, %v1655
        %v1657 = vpop.f32.mrb[0].mxu0
        %v1658 = vadd.f32 %v1435, %v1657
        %v1659 = vpop.f32.mrb[0].mxu0
        %v1660 = vadd.f32 %v1437, %v1659
        %1661 = vmatprep.mubr.bf16.mxu0 %v829
        %1662 = vmatmul.mubr.bf16.gmra.mrb[0].mxu0 %v828
        %v1663 = vpop.f32.mrb[0].mxu0
        %v1664 = vadd.f32 %v1441, %v1663
        %v1665 = vpop.f32.mrb[0].mxu0
        %v1666 = vadd.f32 %v1443, %v1665
        %v1667 = vpop.f32.mrb[0].mxu0
        %v1668 = vadd.f32 %v1445, %v1667
        %v1669 = vpop.f32.mrb[0].mxu0
        %v1670 = vadd.f32 %v1447, %v1669
        %1671 = vdwg.mxu0
        %v1672 = vmax.f32 %v1486, -30.0
        %v1673 = vmax.f32 %v1490, -30.0
        %v1674 = vmax.f32 %v1496, -30.0
        %v1675 = vmax.f32 %v1500, -30.0
        %v1676 = vmax.f32 %v1506, -30.0
        %v1677 = vmax.f32 %v1510, -30.0
        %v1678 = vmax.f32 %v1516, -30.0
        %v1679 = vmax.f32 %v1520, -30.0
        %v1680 = vmax.f32 %v1526, -30.0
        %v1681 = vmax.f32 %v1530, -30.0
        %v1682 = vmax.f32 %v1536, -30.0
        %v1683 = vmax.f32 %v1540, -30.0
        %v1684 = vmax.f32 %v1546, -30.0
        %v1685 = vmax.f32 %v1550, -30.0
        %v1686 = vmax.f32 %v1556, -30.0
        %v1687 = vmax.f32 %v1560, -30.0
        %v1688 = vmax.f32 %v1566, -30.0
        %v1689 = vmax.f32 %v1570, -30.0
        %v1690 = vmax.f32 %v1576, -30.0
        %v1691 = vmax.f32 %v1580, -30.0
        %v1692 = vmax.f32 %v1586, -30.0
        %v1693 = vmax.f32 %v1590, -30.0
        %v1694 = vmax.f32 %v1596, -30.0
        %v1695 = vmax.f32 %v1600, -30.0
        %v1696 = vmax.f32 %v1606, -30.0
        %v1697 = vmax.f32 %v1610, -30.0
        %v1698 = vmax.f32 %v1616, -30.0
        %v1699 = vmax.f32 %v1620, -30.0
        %v1700 = vmax.f32 %v1626, -30.0
        %v1701 = vmax.f32 %v1630, -30.0
        %v1702 = vmax.f32 %v1636, -30.0
        %v1703 = vmax.f32 %v1640, -30.0
        %v1704 = vmax.f32 %v1646, -30.0
        %v1705 = vmax.f32 %v1650, -30.0
        %v1706 = vmax.f32 %v1656, -30.0
        %v1707 = vmax.f32 %v1660, -30.0
        %v1708 = vmax.f32 %v1666, -30.0
        %v1709 = vmax.f32 %v1670, -30.0
        %v1710 = vsub.f32 0.0, %v1672
        %v1711 = vsub.f32 0.0, %v1673
        %v1712 = vsub.f32 0.0, %v1674
        %v1713 = vsub.f32 0.0, %v1675
        %v1714 = vsub.f32 0.0, %v1676
        %v1715 = vsub.f32 0.0, %v1677
        %v1716 = vsub.f32 0.0, %v1678
        %v1717 = vsub.f32 0.0, %v1679
        %v1718 = vsub.f32 0.0, %v1680
        %v1719 = vsub.f32 0.0, %v1681
        %v1720 = vsub.f32 0.0, %v1682
        %v1721 = vsub.f32 0.0, %v1683
        %v1722 = vsub.f32 0.0, %v1684
        %v1723 = vsub.f32 0.0, %v1685
        %v1724 = vsub.f32 0.0, %v1686
        %v1725 = vsub.f32 0.0, %v1687
        %v1726 = vsub.f32 0.0, %v1688
        %v1727 = vsub.f32 0.0, %v1689
        %v1728 = vsub.f32 0.0, %v1690
        %v1729 = vsub.f32 0.0, %v1691
        %v1730 = vsub.f32 0.0, %v1692
        %v1731 = vsub.f32 0.0, %v1693
        %v1732 = vsub.f32 0.0, %v1694
        %v1733 = vsub.f32 0.0, %v1695
        %v1734 = vsub.f32 0.0, %v1696
        %v1735 = vsub.f32 0.0, %v1697
        %v1736 = vsub.f32 0.0, %v1698
        %v1737 = vsub.f32 0.0, %v1699
        %v1738 = vsub.f32 0.0, %v1700
        %v1739 = vsub.f32 0.0, %v1701
        %v1740 = vsub.f32 0.0, %v1702
        %v1741 = vsub.f32 0.0, %v1703
        %v1742 = vsub.f32 0.0, %v1704
        %v1743 = vsub.f32 0.0, %v1705
        %v1744 = vsub.f32 0.0, %v1706
        %v1745 = vsub.f32 0.0, %v1707
        %v1746 = vsub.f32 0.0, %v1708
        %v1747 = vsub.f32 0.0, %v1709
        %v1748 = vmul.f32 %v1710, 1.442695
        %v1749 = vpow.pop %v1748
        %v1750 = vmul.f32 %v1711, 1.442695
        %v1751 = vpow.pop %v1750
        %v1752 = vmul.f32 %v1712, 1.442695
        %v1753 = vpow.pop %v1752
        %v1754 = vmul.f32 %v1713, 1.442695
        %v1755 = vpow.pop %v1754
        %v1756 = vmul.f32 %v1714, 1.442695
        %v1757 = vpow.pop %v1756
        %v1758 = vmul.f32 %v1715, 1.442695
        %v1759 = vpow.pop %v1758
        %v1760 = vmul.f32 %v1716, 1.442695
        %v1761 = vpow.pop %v1760
        %v1762 = vmul.f32 %v1717, 1.442695
        %v1763 = vpow.pop %v1762
        %v1764 = vmul.f32 %v1718, 1.442695
        %v1765 = vpow.pop %v1764
        %v1766 = vmul.f32 %v1719, 1.442695
        %v1767 = vpow.pop %v1766
        %v1768 = vmul.f32 %v1720, 1.442695
        %v1769 = vpow.pop %v1768
        %v1770 = vmul.f32 %v1721, 1.442695
        %v1771 = vpow.pop %v1770
        %v1772 = vmul.f32 %v1722, 1.442695
        %v1773 = vpow.pop %v1772
        %v1774 = vmul.f32 %v1723, 1.442695
        %v1775 = vpow.pop %v1774
        %v1776 = vmul.f32 %v1724, 1.442695
        %v1777 = vpow.pop %v1776
        %v1778 = vmul.f32 %v1725, 1.442695
        %v1779 = vpow.pop %v1778
        %v1780 = vmul.f32 %v1726, 1.442695
        %v1781 = vpow.pop %v1780
        %v1782 = vmul.f32 %v1727, 1.442695
        %v1783 = vpow.pop %v1782
        %v1784 = vmul.f32 %v1728, 1.442695
        %v1785 = vpow.pop %v1784
        %v1786 = vmul.f32 %v1729, 1.442695
        %v1787 = vpow.pop %v1786
        %v1788 = vmul.f32 %v1730, 1.442695
        %v1789 = vpow.pop %v1788
        %v1790 = vmul.f32 %v1731, 1.442695
        %v1791 = vpow.pop %v1790
        %v1792 = vmul.f32 %v1732, 1.442695
        %v1793 = vpow.pop %v1792
        %v1794 = vmul.f32 %v1733, 1.442695
        %v1795 = vpow.pop %v1794
        %v1796 = vmul.f32 %v1734, 1.442695
        %v1797 = vpow.pop %v1796
        %v1798 = vmul.f32 %v1735, 1.442695
        %v1799 = vpow.pop %v1798
        %v1800 = vmul.f32 %v1736, 1.442695
        %v1801 = vpow.pop %v1800
        %v1802 = vmul.f32 %v1737, 1.442695
        %v1803 = vpow.pop %v1802
        %v1804 = vmul.f32 %v1738, 1.442695
        %v1805 = vpow.pop %v1804
        %v1806 = vmul.f32 %v1739, 1.442695
        %v1807 = vpow.pop %v1806
        %v1808 = vmul.f32 %v1740, 1.442695
        %v1809 = vpow.pop %v1808
        %v1810 = vmul.f32 %v1741, 1.442695
        %v1811 = vpow.pop %v1810
        %v1812 = vmul.f32 %v1742, 1.442695
        %v1813 = vpow.pop %v1812
        %v1814 = vmul.f32 %v1743, 1.442695
        %v1815 = vpow.pop %v1814
        %v1816 = vmul.f32 %v1744, 1.442695
        %v1817 = vpow.pop %v1816
        %v1818 = vmul.f32 %v1745, 1.442695
        %v1819 = vpow.pop %v1818
        %v1820 = vmul.f32 %v1746, 1.442695
        %v1821 = vpow.pop %v1820
        %v1822 = vmul.f32 %v1747, 1.442695
        %v1823 = vpow.pop %v1822
        %v1824 = vadd.f32 %v1749, 1.0
        %v1825 = vadd.f32 %v1751, 1.0
        %v1826 = vadd.f32 %v1753, 1.0
        %v1827 = vadd.f32 %v1755, 1.0
        %v1828 = vadd.f32 %v1757, 1.0
        %v1829 = vadd.f32 %v1759, 1.0
        %v1830 = vadd.f32 %v1761, 1.0
        %v1831 = vadd.f32 %v1763, 1.0
        %v1832 = vadd.f32 %v1765, 1.0
        %v1833 = vadd.f32 %v1767, 1.0
        %v1834 = vadd.f32 %v1769, 1.0
        %v1835 = vadd.f32 %v1771, 1.0
        %v1836 = vadd.f32 %v1773, 1.0
        %v1837 = vadd.f32 %v1775, 1.0
        %v1838 = vadd.f32 %v1777, 1.0
        %v1839 = vadd.f32 %v1779, 1.0
        %v1840 = vadd.f32 %v1781, 1.0
        %v1841 = vadd.f32 %v1783, 1.0
        %v1842 = vadd.f32 %v1785, 1.0
        %v1843 = vadd.f32 %v1787, 1.0
        %v1844 = vadd.f32 %v1789, 1.0
        %v1845 = vadd.f32 %v1791, 1.0
        %v1846 = vadd.f32 %v1793, 1.0
        %v1847 = vadd.f32 %v1795, 1.0
        %v1848 = vadd.f32 %v1797, 1.0
        %v1849 = vadd.f32 %v1799, 1.0
        %v1850 = vadd.f32 %v1801, 1.0
        %v1851 = vadd.f32 %v1803, 1.0
        %v1852 = vadd.f32 %v1805, 1.0
        %v1853 = vadd.f32 %v1807, 1.0
        %v1854 = vadd.f32 %v1809, 1.0
        %v1855 = vadd.f32 %v1811, 1.0
        %v1856 = vadd.f32 %v1813, 1.0
        %v1857 = vadd.f32 %v1815, 1.0
        %v1858 = vadd.f32 %v1817, 1.0
        %v1859 = vadd.f32 %v1819, 1.0
        %v1860 = vadd.f32 %v1821, 1.0
        %v1861 = vadd.f32 %v1823, 1.0
        %v1862 = vrcp.pop %v1824
        %v1863 = vrcp.pop %v1825
        %v1864 = vrcp.pop %v1826
        %v1865 = vrcp.pop %v1827
        %v1866 = vrcp.pop %v1828
        %v1867 = vrcp.pop %v1829
        %v1868 = vrcp.pop %v1830
        %v1869 = vrcp.pop %v1831
        %v1870 = vrcp.pop %v1832
        %v1871 = vrcp.pop %v1833
        %v1872 = vrcp.pop %v1834
        %v1873 = vrcp.pop %v1835
        %v1874 = vrcp.pop %v1836
        %v1875 = vrcp.pop %v1837
        %v1876 = vrcp.pop %v1838
        %v1877 = vrcp.pop %v1839
        %v1878 = vrcp.pop %v1840
        %v1879 = vrcp.pop %v1841
        %v1880 = vrcp.pop %v1842
        %v1881 = vrcp.pop %v1843
        %v1882 = vrcp.pop %v1844
        %v1883 = vrcp.pop %v1845
        %v1884 = vrcp.pop %v1846
        %v1885 = vrcp.pop %v1847
        %v1886 = vrcp.pop %v1848
        %v1887 = vrcp.pop %v1849
        %v1888 = vrcp.pop %v1850
        %v1889 = vrcp.pop %v1851
        %v1890 = vrcp.pop %v1852
        %v1891 = vrcp.pop %v1853
        %v1892 = vrcp.pop %v1854
        %v1893 = vrcp.pop %v1855
        %v1894 = vrcp.pop %v1856
        %v1895 = vrcp.pop %v1857
        %v1896 = vrcp.pop %v1858
        %v1897 = vrcp.pop %v1859
        %v1898 = vrcp.pop %v1860
        %v1899 = vrcp.pop %v1861
        %v1900 = vmax.f32 %v1484, 0.0
        %v1901 = vmax.f32 %v1488, 0.0
        %v1902 = vmax.f32 %v1494, 0.0
        %v1903 = vmax.f32 %v1498, 0.0
        %v1904 = vmax.f32 %v1504, 0.0
        %v1905 = vmax.f32 %v1508, 0.0
        %v1906 = vmax.f32 %v1514, 0.0
        %v1907 = vmax.f32 %v1518, 0.0
        %v1908 = vmax.f32 %v1524, 0.0
        %v1909 = vmax.f32 %v1528, 0.0
        %v1910 = vmax.f32 %v1534, 0.0
        %v1911 = vmax.f32 %v1538, 0.0
        %v1912 = vmax.f32 %v1544, 0.0
        %v1913 = vmax.f32 %v1548, 0.0
        %v1914 = vmax.f32 %v1554, 0.0
        %v1915 = vmax.f32 %v1558, 0.0
        %v1916 = vmax.f32 %v1564, 0.0
        %v1917 = vmax.f32 %v1568, 0.0
        %v1918 = vmax.f32 %v1574, 0.0
        %v1919 = vmax.f32 %v1578, 0.0
        %v1920 = vmax.f32 %v1584, 0.0
        %v1921 = vmax.f32 %v1588, 0.0
        %v1922 = vmax.f32 %v1594, 0.0
        %v1923 = vmax.f32 %v1598, 0.0
        %v1924 = vmax.f32 %v1604, 0.0
        %v1925 = vmax.f32 %v1608, 0.0
        %v1926 = vmax.f32 %v1614, 0.0
        %v1927 = vmax.f32 %v1618, 0.0
        %v1928 = vmax.f32 %v1624, 0.0
        %v1929 = vmax.f32 %v1628, 0.0
        %v1930 = vmax.f32 %v1634, 0.0
        %v1931 = vmax.f32 %v1638, 0.0
        %v1932 = vmax.f32 %v1644, 0.0
        %v1933 = vmax.f32 %v1648, 0.0
        %v1934 = vmax.f32 %v1654, 0.0
        %v1935 = vmax.f32 %v1658, 0.0
        %v1936 = vmax.f32 %v1664, 0.0
        %v1937 = vmax.f32 %v1668, 0.0
        %v1938 = vmul.f32 %v1900, %v1862
        %v1939 = vmul.f32 %v1901, %v1863
        %v1940 = vmul.f32 %v1902, %v1864
        %v1941 = vmul.f32 %v1903, %v1865
        %v1942 = vmul.f32 %v1904, %v1866
        %v1943 = vmul.f32 %v1905, %v1867
        %v1944 = vmul.f32 %v1906, %v1868
        %v1945 = vmul.f32 %v1907, %v1869
        %v1946 = vmul.f32 %v1908, %v1870
        %v1947 = vmul.f32 %v1909, %v1871
        %v1948 = vmul.f32 %v1910, %v1872
        %v1949 = vmul.f32 %v1911, %v1873
        %v1950 = vmul.f32 %v1912, %v1874
        %v1951 = vmul.f32 %v1913, %v1875
        %v1952 = vmul.f32 %v1914, %v1876
        %v1953 = vmul.f32 %v1915, %v1877
        %v1954 = vmul.f32 %v1916, %v1878
        %v1955 = vmul.f32 %v1917, %v1879
        %v1956 = vmul.f32 %v1918, %v1880
        %v1957 = vmul.f32 %v1919, %v1881
        %v1958 = vmul.f32 %v1920, %v1882
        %v1959 = vmul.f32 %v1921, %v1883
        %v1960 = vmul.f32 %v1922, %v1884
        %v1961 = vmul.f32 %v1923, %v1885
        %v1962 = vmul.f32 %v1924, %v1886
        %v1963 = vmul.f32 %v1925, %v1887
        %v1964 = vmul.f32 %v1926, %v1888
        %v1965 = vmul.f32 %v1927, %v1889
        %v1966 = vmul.f32 %v1928, %v1890
        %v1967 = vmul.f32 %v1929, %v1891
        %v1968 = vmul.f32 %v1930, %v1892
        %v1969 = vmul.f32 %v1931, %v1893
        %v1970 = vmul.f32 %v1932, %v1894
        %v1971 = vmul.f32 %v1933, %v1895
        %v1972 = vmul.f32 %v1934, %v1896
        %v1973 = vmul.f32 %v1935, %v1897
        %v1974 = vmul.f32 %v1936, %v1898
        %v1975 = vmul.f32 %v1937, %v1899
        %s1976 = smul.u32 %s30, 304
        %v1977 = vlaneseq
        %v1978 = vshrl.u32 %v1977, 7
        %v1979 = vadd.s32 %v1978, 8
        %v1980 = vadd.s32 %v1978, 16
        %v1981 = vadd.s32 %v1978, 24
        %v1982 = vadd.s32 %v1978, 32
        %v1983 = vadd.s32 %v1978, 40
        %v1984 = vadd.s32 %v1978, 48
        %v1985 = vadd.s32 %v1978, 56
        %v1986 = vadd.s32 %v1978, 64
        %v1987 = vadd.s32 %v1978, 72
        %v1988 = vadd.s32 %v1978, 80
        %v1989 = vadd.s32 %v1978, 88
        %v1990 = vadd.s32 %v1978, 96
        %v1991 = vadd.s32 %v1978, 104
        %v1992 = vadd.s32 %v1978, 112
        %v1993 = vadd.s32 %v1978, 120
        %v1994 = vadd.s32 %v1978, 128
        %v1995 = vadd.s32 %v1978, 136
        %v1996 = vadd.s32 %v1978, 144
        %v1997 = vadd.s32 %v1978, 152
        %v1998 = vadd.s32 %v1978, 160
        %v1999 = vadd.s32 %v1978, 168
        %v2000 = vadd.s32 %v1978, 176
        %v2001 = vadd.s32 %v1978, 184
        %v2002 = vadd.s32 %v1978, 192
        %v2003 = vadd.s32 %v1978, 200
        %v2004 = vadd.s32 %v1978, 208
        %v2005 = vadd.s32 %v1978, 216
        %v2006 = vadd.s32 %v1978, 224
        %v2007 = vadd.s32 %v1978, 232
        %v2008 = vadd.s32 %v1978, 240
        %v2009 = vadd.s32 %v1978, 248
        %v2010 = vadd.s32 %v1978, 256
        %v2011 = vadd.s32 %v1978, 264
        %v2012 = vadd.s32 %v1978, 272
        %v2013 = vadd.s32 %v1978, 280
        %v2014 = vadd.s32 %v1978, 288
        %v2015 = vadd.s32 %v1978, 296
        %v2016 = vstv %s1976
        %v2017 = vadd.s32 %v2016, %v1978
        %v2018 = vadd.s32 %v2016, %v1979
        %v2019 = vadd.s32 %v2016, %v1980
        %v2020 = vadd.s32 %v2016, %v1981
        %v2021 = vadd.s32 %v2016, %v1982
        %v2022 = vadd.s32 %v2016, %v1983
        %v2023 = vadd.s32 %v2016, %v1984
        %v2024 = vadd.s32 %v2016, %v1985
        %v2025 = vadd.s32 %v2016, %v1986
        %v2026 = vadd.s32 %v2016, %v1987
        %v2027 = vadd.s32 %v2016, %v1988
        %v2028 = vadd.s32 %v2016, %v1989
        %v2029 = vadd.s32 %v2016, %v1990
        %v2030 = vadd.s32 %v2016, %v1991
        %v2031 = vadd.s32 %v2016, %v1992
        %v2032 = vadd.s32 %v2016, %v1993
        %v2033 = vadd.s32 %v2016, %v1994
        %v2034 = vadd.s32 %v2016, %v1995
        %v2035 = vadd.s32 %v2016, %v1996
        %v2036 = vadd.s32 %v2016, %v1997
        %v2037 = vadd.s32 %v2016, %v1998
        %v2038 = vadd.s32 %v2016, %v1999
        %v2039 = vadd.s32 %v2016, %v2000
        %v2040 = vadd.s32 %v2016, %v2001
        %v2041 = vadd.s32 %v2016, %v2002
        %v2042 = vadd.s32 %v2016, %v2003
        %v2043 = vadd.s32 %v2016, %v2004
        %v2044 = vadd.s32 %v2016, %v2005
        %v2045 = vadd.s32 %v2016, %v2006
        %v2046 = vadd.s32 %v2016, %v2007
        %v2047 = vadd.s32 %v2016, %v2008
        %v2048 = vadd.s32 %v2016, %v2009
        %v2049 = vadd.s32 %v2016, %v2010
        %v2050 = vadd.s32 %v2016, %v2011
        %v2051 = vadd.s32 %v2016, %v2012
        %v2052 = vadd.s32 %v2016, %v2013
        %v2053 = vadd.s32 %v2016, %v2014
        %v2054 = vadd.s32 %v2016, %v2015
        %vm2055 = vcmp.lt.s32.totalorder %v2017, 600
        %vm2056 = vcmp.lt.s32.totalorder %v2018, 600
        %vm2057 = vcmp.lt.s32.totalorder %v2019, 600
        %vm2058 = vcmp.lt.s32.totalorder %v2020, 600
        %vm2059 = vcmp.lt.s32.totalorder %v2021, 600
        %vm2060 = vcmp.lt.s32.totalorder %v2022, 600
        %vm2061 = vcmp.lt.s32.totalorder %v2023, 600
        %vm2062 = vcmp.lt.s32.totalorder %v2024, 600
        %vm2063 = vcmp.lt.s32.totalorder %v2025, 600
        %vm2064 = vcmp.lt.s32.totalorder %v2026, 600
        %vm2065 = vcmp.lt.s32.totalorder %v2027, 600
        %vm2066 = vcmp.lt.s32.totalorder %v2028, 600
        %vm2067 = vcmp.lt.s32.totalorder %v2029, 600
        %vm2068 = vcmp.lt.s32.totalorder %v2030, 600
        %vm2069 = vcmp.lt.s32.totalorder %v2031, 600
        %vm2070 = vcmp.lt.s32.totalorder %v2032, 600
        %vm2071 = vcmp.lt.s32.totalorder %v2033, 600
        %vm2072 = vcmp.lt.s32.totalorder %v2034, 600
        %vm2073 = vcmp.lt.s32.totalorder %v2035, 600
        %vm2074 = vcmp.lt.s32.totalorder %v2036, 600
        %vm2075 = vcmp.lt.s32.totalorder %v2037, 600
        %vm2076 = vcmp.lt.s32.totalorder %v2038, 600
        %vm2077 = vcmp.lt.s32.totalorder %v2039, 600
        %vm2078 = vcmp.lt.s32.totalorder %v2040, 600
        %vm2079 = vcmp.lt.s32.totalorder %v2041, 600
        %vm2080 = vcmp.lt.s32.totalorder %v2042, 600
        %vm2081 = vcmp.lt.s32.totalorder %v2043, 600
        %vm2082 = vcmp.lt.s32.totalorder %v2044, 600
        %vm2083 = vcmp.lt.s32.totalorder %v2045, 600
        %vm2084 = vcmp.lt.s32.totalorder %v2046, 600
        %vm2085 = vcmp.lt.s32.totalorder %v2047, 600
        %vm2086 = vcmp.lt.s32.totalorder %v2048, 600
        %vm2087 = vcmp.lt.s32.totalorder %v2049, 600
        %vm2088 = vcmp.lt.s32.totalorder %v2050, 600
        %vm2089 = vcmp.lt.s32.totalorder %v2051, 600
        %vm2090 = vcmp.lt.s32.totalorder %v2052, 600
        %vm2091 = vcmp.lt.s32.totalorder %v2053, 600
        %vm2092 = vcmp.lt.s32.totalorder %v2054, 600
        %v2093 = vsel %vm2055, 1, 0
        %v2094 = vsel %vm2056, 1, 0
        %v2095 = vsel %vm2057, 1, 0
        %v2096 = vsel %vm2058, 1, 0
        %v2097 = vsel %vm2059, 1, 0
        %v2098 = vsel %vm2060, 1, 0
        %v2099 = vsel %vm2061, 1, 0
        %v2100 = vsel %vm2062, 1, 0
        %v2101 = vsel %vm2063, 1, 0
        %v2102 = vsel %vm2064, 1, 0
        %v2103 = vsel %vm2065, 1, 0
        %v2104 = vsel %vm2066, 1, 0
        %v2105 = vsel %vm2067, 1, 0
        %v2106 = vsel %vm2068, 1, 0
        %v2107 = vsel %vm2069, 1, 0
        %v2108 = vsel %vm2070, 1, 0
        %v2109 = vsel %vm2071, 1, 0
        %v2110 = vsel %vm2072, 1, 0
        %v2111 = vsel %vm2073, 1, 0
        %v2112 = vsel %vm2074, 1, 0
        %v2113 = vsel %vm2075, 1, 0
        %v2114 = vsel %vm2076, 1, 0
        %v2115 = vsel %vm2077, 1, 0
        %v2116 = vsel %vm2078, 1, 0
        %v2117 = vsel %vm2079, 1, 0
        %v2118 = vsel %vm2080, 1, 0
        %v2119 = vsel %vm2081, 1, 0
        %v2120 = vsel %vm2082, 1, 0
        %v2121 = vsel %vm2083, 1, 0
        %v2122 = vsel %vm2084, 1, 0
        %v2123 = vsel %vm2085, 1, 0
        %v2124 = vsel %vm2086, 1, 0
        %v2125 = vsel %vm2087, 1, 0
        %v2126 = vsel %vm2088, 1, 0
        %v2127 = vsel %vm2089, 1, 0
        %v2128 = vsel %vm2090, 1, 0
        %v2129 = vsel %vm2091, 1, 0
        %v2130 = vsel %vm2092, 1, 0
        %vm2131 = vcmp.eq.s32.totalorder %v2093, 1
        %vm2132 = vcmp.eq.s32.totalorder %v2094, 1
        %vm2133 = vcmp.eq.s32.totalorder %v2095, 1
        %vm2134 = vcmp.eq.s32.totalorder %v2096, 1
        %vm2135 = vcmp.eq.s32.totalorder %v2097, 1
        %vm2136 = vcmp.eq.s32.totalorder %v2098, 1
        %vm2137 = vcmp.eq.s32.totalorder %v2099, 1
        %vm2138 = vcmp.eq.s32.totalorder %v2100, 1
        %vm2139 = vcmp.eq.s32.totalorder %v2101, 1
        %vm2140 = vcmp.eq.s32.totalorder %v2102, 1
        %vm2141 = vcmp.eq.s32.totalorder %v2103, 1
        %vm2142 = vcmp.eq.s32.totalorder %v2104, 1
        %vm2143 = vcmp.eq.s32.totalorder %v2105, 1
        %vm2144 = vcmp.eq.s32.totalorder %v2106, 1
        %vm2145 = vcmp.eq.s32.totalorder %v2107, 1
        %vm2146 = vcmp.eq.s32.totalorder %v2108, 1
        %vm2147 = vcmp.eq.s32.totalorder %v2109, 1
        %vm2148 = vcmp.eq.s32.totalorder %v2110, 1
        %vm2149 = vcmp.eq.s32.totalorder %v2111, 1
        %vm2150 = vcmp.eq.s32.totalorder %v2112, 1
        %vm2151 = vcmp.eq.s32.totalorder %v2113, 1
        %vm2152 = vcmp.eq.s32.totalorder %v2114, 1
        %vm2153 = vcmp.eq.s32.totalorder %v2115, 1
        %vm2154 = vcmp.eq.s32.totalorder %v2116, 1
        %vm2155 = vcmp.eq.s32.totalorder %v2117, 1
        %vm2156 = vcmp.eq.s32.totalorder %v2118, 1
        %vm2157 = vcmp.eq.s32.totalorder %v2119, 1
        %vm2158 = vcmp.eq.s32.totalorder %v2120, 1
        %vm2159 = vcmp.eq.s32.totalorder %v2121, 1
        %vm2160 = vcmp.eq.s32.totalorder %v2122, 1
        %vm2161 = vcmp.eq.s32.totalorder %v2123, 1
        %vm2162 = vcmp.eq.s32.totalorder %v2124, 1
        %vm2163 = vcmp.eq.s32.totalorder %v2125, 1
        %vm2164 = vcmp.eq.s32.totalorder %v2126, 1
        %vm2165 = vcmp.eq.s32.totalorder %v2127, 1
        %vm2166 = vcmp.eq.s32.totalorder %v2128, 1
        %vm2167 = vcmp.eq.s32.totalorder %v2129, 1
        %vm2168 = vcmp.eq.s32.totalorder %v2130, 1
        %v2169 = vsel %vm2131, %v1938, -inf
        %v2170 = vsel %vm2132, %v1939, -inf
        %v2171 = vsel %vm2133, %v1940, -inf
        %v2172 = vsel %vm2134, %v1941, -inf
        %v2173 = vsel %vm2135, %v1942, -inf
        %v2174 = vsel %vm2136, %v1943, -inf
        %v2175 = vsel %vm2137, %v1944, -inf
        %v2176 = vsel %vm2138, %v1945, -inf
        %v2177 = vsel %vm2139, %v1946, -inf
        %v2178 = vsel %vm2140, %v1947, -inf
        %v2179 = vsel %vm2141, %v1948, -inf
        %v2180 = vsel %vm2142, %v1949, -inf
        %v2181 = vsel %vm2143, %v1950, -inf
        %v2182 = vsel %vm2144, %v1951, -inf
        %v2183 = vsel %vm2145, %v1952, -inf
        %v2184 = vsel %vm2146, %v1953, -inf
        %v2185 = vsel %vm2147, %v1954, -inf
        %v2186 = vsel %vm2148, %v1955, -inf
        %v2187 = vsel %vm2149, %v1956, -inf
        %v2188 = vsel %vm2150, %v1957, -inf
        %v2189 = vsel %vm2151, %v1958, -inf
        %v2190 = vsel %vm2152, %v1959, -inf
        %v2191 = vsel %vm2153, %v1960, -inf
        %v2192 = vsel %vm2154, %v1961, -inf
        %v2193 = vsel %vm2155, %v1962, -inf
        %v2194 = vsel %vm2156, %v1963, -inf
        %v2195 = vsel %vm2157, %v1964, -inf
        %v2196 = vsel %vm2158, %v1965, -inf
        %v2197 = vsel %vm2159, %v1966, -inf
        %v2198 = vsel %vm2160, %v1967, -inf
        %v2199 = vsel %vm2161, %v1968, -inf
        %v2200 = vsel %vm2162, %v1969, -inf
        %v2201 = vsel %vm2163, %v1970, -inf
        %v2202 = vsel %vm2164, %v1971, -inf
        %v2203 = vsel %vm2165, %v1972, -inf
        %v2204 = vsel %vm2166, %v1973, -inf
        %v2205 = vsel %vm2167, %v1974, -inf
        %v2206 = vsel %vm2168, %v1975, -inf
        %v2207 = vld [vmem:[#allocation2] sm:$0x1]
        %v2208 = vmax.f32 %v2169, %v2173
        %v2209 = vmax.f32 %v2170, %v2174
        %v2210 = vmax.f32 %v2171, %v2175
        %v2211 = vmax.f32 %v2172, %v2176
        %v2212 = vmax.f32 %v2208, %v2177
        %v2213 = vmax.f32 %v2209, %v2178
        %v2214 = vmax.f32 %v2210, %v2179
        %v2215 = vmax.f32 %v2211, %v2180
        %v2216 = vmax.f32 %v2212, %v2181
        %v2217 = vmax.f32 %v2213, %v2182
        %v2218 = vmax.f32 %v2214, %v2183
        %v2219 = vmax.f32 %v2215, %v2184
        %v2220 = vmax.f32 %v2216, %v2185
        %v2221 = vmax.f32 %v2217, %v2186
        %v2222 = vmax.f32 %v2218, %v2187
        %v2223 = vmax.f32 %v2219, %v2188
        %v2224 = vmax.f32 %v2220, %v2189
        %v2225 = vmax.f32 %v2221, %v2190
        %v2226 = vmax.f32 %v2222, %v2191
        %v2227 = vmax.f32 %v2223, %v2192
        %v2228 = vmax.f32 %v2224, %v2193
        %v2229 = vmax.f32 %v2225, %v2194
        %v2230 = vmax.f32 %v2226, %v2195
        %v2231 = vmax.f32 %v2227, %v2196
        %v2232 = vmax.f32 %v2228, %v2197
        %v2233 = vmax.f32 %v2229, %v2198
        %v2234 = vmax.f32 %v2230, %v2199
        %v2235 = vmax.f32 %v2231, %v2200
        %v2236 = vmax.f32 %v2232, %v2201
        %v2237 = vmax.f32 %v2233, %v2202
        %v2238 = vmax.f32 %v2234, %v2203
        %v2239 = vmax.f32 %v2235, %v2204
        %v2240 = vmax.f32 %v2236, %v2205
        %v2241 = vmax.f32 %v2237, %v2206
        %v2242 = vmax.f32 %v2240, %v2241
        %v2243 = vmax.f32 %v2238, %v2239
        %v2244 = vmax.f32 %v2242, %v2243
        %v2245 = vrot.slane %v2244, 4
        %v2246 = vmax.f32 %v2244, %v2245
        %v2247 = vrot.slane %v2246, 2
        %v2248 = vmax.f32 %v2246, %v2247
        %v2249 = vrot.slane %v2248, 1
        %v2250 = vmax.f32 %v2248, %v2249
        %v2251 = vmax.f32 %v2207, %v2250
        %2252 = vst [vmem:[#allocation2] sm:$0x1] %v2251
        %p2253 = scmp.eq.s32.totalorder %s30, 1
        // Predicated region
        $region73: #{tpu_custom_call.1} parent=47 // pred_check
          %p2254 = pneg %p2253
        $region74: #{tpu_custom_call.1} parent=47 // pred_check_branch
          %2256 = sbr.rel (%p2254) target = $region76
        $region75: #{tpu_custom_call.1} parent=47 // pred_region
          %v2257 = vld [vmem:[#allocation2] sm:$0x1]
          %v2258 = vld [vmem:[#allocation9] sm:$0xff]
          %v2259 = vld [vmem:[#allocation9 + $0x8] sm:$0xff]
          %v2260 = vld [vmem:[#allocation9 + $0x10] sm:$0xff]
          %v2261 = vld [vmem:[#allocation9 + $0x18] sm:$0xff]
          %v2262 = vld [vmem:[#allocation9 + $0x20] sm:$0xff]
          %v2263 = vld [vmem:[#allocation9 + $0x28] sm:$0xff]
          %v2264 = vld [vmem:[#allocation9 + $0x30] sm:$0xff]
          %v2265 = vld [vmem:[#allocation9 + $0x38] sm:$0xff]
          %v2266 = vld [vmem:[#allocation9 + $0x40] sm:$0xff]
          %v2267 = vld [vmem:[#allocation9 + $0x48] sm:$0xff]
          %v2268 = vld [vmem:[#allocation9 + $0x50] sm:$0xff]
          %v2269 = vld [vmem:[#allocation9 + $0x58] sm:$0xff]
          %v2270 = vld [vmem:[#allocation9 + $0x60] sm:$0xff]
          %v2271 = vld [vmem:[#allocation9 + $0x68] sm:$0xff]
          %v2272 = vld [vmem:[#allocation9 + $0x70] sm:$0xff]
          %v2273 = vld [vmem:[#allocation9 + $0x78] sm:$0xff]
          %v2274 = vld [vmem:[#allocation11] sm:$0x1]
          %2275 = vmatprep.subr.mxu0 0.0
          %2276 = vmatpush1.msra.mxu0 %v2258
          %2277 = vmatprep.subr.mxu0 0.0
          %2278 = vmatpush1.msra.mxu0 %v2259
          %2279 = vmatprep.subr.mxu0 0.0
          %2280 = vmatpush1.msra.mxu0 %v2260
          %2281 = vmatprep.subr.mxu0 0.0
          %2282 = vmatpush1.msra.mxu0 %v2261
          %2283 = vmatprep.subr.mxu0 0.0
          %2284 = vmatpush1.msra.mxu0 %v2262
          %2285 = vmatprep.subr.mxu0 0.0
          %2286 = vmatpush1.msra.mxu0 %v2263
          %2287 = vmatprep.subr.mxu0 0.0
          %2288 = vmatpush1.msra.mxu0 %v2264
          %2289 = vmatprep.subr.mxu0 0.0
          %2290 = vmatpush1.msra.mxu0 %v2265
          %2291 = vmatprep.subr.mxu0 0.0
          %2292 = vmatpush1.msra.mxu0 %v2266
          %2293 = vmatprep.subr.mxu0 0.0
          %2294 = vmatpush1.msra.mxu0 %v2267
          %2295 = vmatprep.subr.mxu0 0.0
          %2296 = vmatpush1.msra.mxu0 %v2268
          %2297 = vmatprep.subr.mxu0 0.0
          %2298 = vmatpush1.msra.mxu0 %v2269
          %2299 = vmatprep.subr.mxu0 0.0
          %2300 = vmatpush1.msra.mxu0 %v2270
          %2301 = vmatprep.subr.mxu0 0.0
          %2302 = vmatpush1.msra.mxu0 %v2271
          %2303 = vmatprep.subr.mxu0 0.0
          %2304 = vmatpush1.msra.mxu0 %v2272
          %2305 = vmatprep.subr.mxu0 0.0
          %2306 = vmatpush1.msra.mxu0 %v2273
          %2307 = vmatprep.subr.mxu0 0.0
          %2308 = vmatpush1.msra.mxu0 0.0
          %2309 = vmatprep.subr.mxu0 0.0
          %2310 = vmatpush1.msra.mxu0 0.0
          %2311 = vmatprep.subr.mxu0 0.0
          %2312 = vmatpush1.msra.mxu0 0.0
          %2313 = vmatprep.subr.mxu0 0.0
          %2314 = vmatpush1.msra.mxu0 0.0
          %2315 = vmatprep.subr.mxu0 0.0
          %2316 = vmatpush1.msra.mxu0 0.0
          %2317 = vmatprep.subr.mxu0 0.0
          %2318 = vmatpush1.msra.mxu0 0.0
          %2319 = vmatprep.subr.mxu0 0.0
          %2320 = vmatpush1.msra.mxu0 0.0
          %2321 = vmatprep.subr.mxu0 0.0
          %2322 = vmatpush1.msra.mxu0 0.0
          %2323 = vmatprep.subr.mxu0 0.0
          %2324 = vmatpush1.msra.mxu0 0.0
          %2325 = vmatprep.subr.mxu0 0.0
          %2326 = vmatpush1.msra.mxu0 0.0
          %2327 = vmatprep.subr.mxu0 0.0
          %2328 = vmatpush1.msra.mxu0 0.0
          %2329 = vmatprep.subr.mxu0 0.0
          %2330 = vmatpush1.msra.mxu0 0.0
          %2331 = vmatprep.subr.mxu0 0.0
          %2332 = vmatpush1.msra.mxu0 0.0
          %2333 = vmatprep.subr.mxu0 0.0
          %2334 = vmatpush1.msra.mxu0 0.0
          %2335 = vmatprep.subr.mxu0 0.0
          %2336 = vmatpush1.msra.mxu0 0.0
          %2337 = vmatprep.subr.mxu0 0.0
          %2338 = vmatpush1.msra.mxu0 0.0
          %2339 = vmatprep.mubr.f32.mxu0 0.0
          %2340 = vmatmul.mubr.f32.gmra.mrb[0].mxu0 %v2257
          %v2341 = vpop.f32.mrb[0].mxu0
          %v2342 = vadd.f32 %v2274, %v2341
          %v2343 = vpop.f32.mrb[0].mxu0
          %2344 = vdwg.mxu0
          %v2345 = vmax.f32 %v2342, 0.0
          %v2346 = vld [vmem:[%s5] sm:$0xff]
          %v2347 = vld [vmem:[%s5 + $0x8] sm:$0xff]
          %v2348 = vld [vmem:[%s5 + $0x10] sm:$0xff]
          %v2349 = vld [vmem:[%s5 + $0x18] sm:$0xff]
          %v2350 = vld [vmem:[%s5 + $0x20] sm:$0xff]
          %v2351 = vld [vmem:[%s5 + $0x28] sm:$0xff]
          %v2352 = vld [vmem:[%s5 + $0x30] sm:$0xff]
          %v2353 = vld [vmem:[%s5 + $0x38] sm:$0xff]
          %v2354 = vld [vmem:[%s5 + $0x40] sm:$0xff]
          %v2355 = vld [vmem:[%s5 + $0x48] sm:$0xff]
          %v2356 = vld [vmem:[%s5 + $0x50] sm:$0xff]
          %v2357 = vld [vmem:[%s5 + $0x58] sm:$0xff]
          %v2358 = vld [vmem:[%s5 + $0x60] sm:$0xff]
          %v2359 = vld [vmem:[%s5 + $0x68] sm:$0xff]
          %v2360 = vld [vmem:[%s5 + $0x70] sm:$0xff]
          %v2361 = vld [vmem:[%s5 + $0x78] sm:$0xff]
          %v2362 = vld [vmem:[#allocation3] sm:$0x1]
          %2363 = vmatprep.subr.mxu0 0.0
          %2364 = vmatpush1.msra.mxu0 %v2346
          %2365 = vmatprep.subr.mxu0 0.0
          %2366 = vmatpush1.msra.mxu0 %v2347
          %2367 = vmatprep.subr.mxu0 0.0
          %2368 = vmatpush1.msra.mxu0 %v2348
          %2369 = vmatprep.subr.mxu0 0.0
          %2370 = vmatpush1.msra.mxu0 %v2349
          %2371 = vmatprep.subr.mxu0 0.0
          %2372 = vmatpush1.msra.mxu0 %v2350
          %2373 = vmatprep.subr.mxu0 0.0
          %2374 = vmatpush1.msra.mxu0 %v2351
          %2375 = vmatprep.subr.mxu0 0.0
          %2376 = vmatpush1.msra.mxu0 %v2352
          %2377 = vmatprep.subr.mxu0 0.0
          %2378 = vmatpush1.msra.mxu0 %v2353
          %2379 = vmatprep.subr.mxu0 0.0
          %2380 = vmatpush1.msra.mxu0 %v2354
          %2381 = vmatprep.subr.mxu0 0.0
          %2382 = vmatpush1.msra.mxu0 %v2355
          %2383 = vmatprep.subr.mxu0 0.0
          %2384 = vmatpush1.msra.mxu0 %v2356
          %2385 = vmatprep.subr.mxu0 0.0
          %2386 = vmatpush1.msra.mxu0 %v2357
          %2387 = vmatprep.subr.mxu0 0.0
          %2388 = vmatpush1.msra.mxu0 %v2358
          %2389 = vmatprep.subr.mxu0 0.0
          %2390 = vmatpush1.msra.mxu0 %v2359
          %2391 = vmatprep.subr.mxu0 0.0
          %2392 = vmatpush1.msra.mxu0 %v2360
          %2393 = vmatprep.subr.mxu0 0.0
          %2394 = vmatpush1.msra.mxu0 %v2361
          %2395 = vmatprep.subr.mxu0 0.0
          %2396 = vmatpush1.msra.mxu0 0.0
          %2397 = vmatprep.subr.mxu0 0.0
          %2398 = vmatpush1.msra.mxu0 0.0
          %2399 = vmatprep.subr.mxu0 0.0
          %2400 = vmatpush1.msra.mxu0 0.0
          %2401 = vmatprep.subr.mxu0 0.0
          %2402 = vmatpush1.msra.mxu0 0.0
          %2403 = vmatprep.subr.mxu0 0.0
          %2404 = vmatpush1.msra.mxu0 0.0
          %2405 = vmatprep.subr.mxu0 0.0
          %2406 = vmatpush1.msra.mxu0 0.0
          %2407 = vmatprep.subr.mxu0 0.0
          %2408 = vmatpush1.msra.mxu0 0.0
          %2409 = vmatprep.subr.mxu0 0.0
          %2410 = vmatpush1.msra.mxu0 0.0
          %2411 = vmatprep.subr.mxu0 0.0
          %2412 = vmatpush1.msra.mxu0 0.0
          %2413 = vmatprep.subr.mxu0 0.0
          %2414 = vmatpush1.msra.mxu0 0.0
          %2415 = vmatprep.subr.mxu0 0.0
          %2416 = vmatpush1.msra.mxu0 0.0
          %2417 = vmatprep.subr.mxu0 0.0
          %2418 = vmatpush1.msra.mxu0 0.0
          %2419 = vmatprep.subr.mxu0 0.0
          %2420 = vmatpush1.msra.mxu0 0.0
          %2421 = vmatprep.subr.mxu0 0.0
          %2422 = vmatpush1.msra.mxu0 0.0
          %2423 = vmatprep.subr.mxu0 0.0
          %2424 = vmatpush1.msra.mxu0 0.0
          %2425 = vmatprep.subr.mxu0 0.0
          %2426 = vmatpush1.msra.mxu0 0.0
          %2427 = vmatprep.mubr.f32.mxu0 0.0
          %2428 = vmatmul.mubr.f32.gmra.mrb[0].mxu0 %v2345
          %v2429 = vpop.f32.mrb[0].mxu0
          %v2430 = vadd.f32 %v2362, %v2429
          %v2431 = vpop.f32.mrb[0].mxu0
          %2432 = vdwg.mxu0
          %v2433 = vxor.u32 %v2430, 2147483648
          %v2434 = vmul.f32 %v2433, 1.442695
          %v2435 = vpow.pop %v2434
          %v2436 = vadd.f32 %v2435, 1.0
          %v2437 = vrcp.pop %v2436
          %v2438 = vmul.f32 1.0, %v2437
          %vm2439 = vcmask 0
          %2440 = vst.msk [vmem:[%s368] sm:$0x1] %vm2439, %v2438
        $region76: #{tpu_custom_call.1} parent=47 // pred_fallthru
          _
        %p2441 = scmp.lt.s32.totalorder %s29, 1
        %s2442 = scalar_select %p2441, %s29, 1
        %s2443 = scalar_lea.vmem %s7, %s2442
        // Predicated region
        $region77: #{tpu_custom_call.1} parent=47 // pred_check
          %p2444 = pneg %p209
        $region78: #{tpu_custom_call.1} parent=47 // pred_check_branch
          %2446 = sbr.rel (%p2444) target = $region80
        $region79: #{tpu_custom_call.1} parent=47 // pred_region
          _
        $region80: #{tpu_custom_call.1} parent=47 // pred_fallthru
          _
      $region48: #{tpu_custom_call.1} parent=5 // pred_fallthru
        _
      %p2447 = scmp.le.s32.totalorder 2, %s20
      // Predicated region
      $region81: #{tpu_custom_call.1} parent=5 // pred_check
        %p2448 = pneg %p2447
      $region82: #{tpu_custom_call.1} parent=5 // pred_check_branch
        %2450 = sbr.rel (%p2448) target = $region84
      $region83: #{tpu_custom_call.1} parent=5 // pred_region
        %s2451 = ssub.s32 %s20, 2
        // Predicated region
        $region85: #{tpu_custom_call.1} parent=83 // pred_check
          %p2452 = pneg %p215
        $region86: #{tpu_custom_call.1} parent=83 // pred_check_branch
          %2454 = sbr.rel (%p2452) target = $region88
        $region87: #{tpu_custom_call.1} parent=83 // pred_region
          %p2455 = scmp.lt.s32.totalorder %s31, 1
          %s2456 = scalar_select %p2455, %s31, 1
          %s2457 = scalar_lea.vmem %s7, %s2456
        $region88: #{tpu_custom_call.1} parent=83 // pred_fallthru
          _
      $region84: #{tpu_custom_call.1} parent=5 // pred_fallthru
        _
    $region6: #{tpu_custom_call.1} parent=1 // loop_footer
      %s24 = sadd.s32 1, %s20
    $region7: #{tpu_custom_call.1} parent=1 // loop_footer_branch
      %19 = sbr.rel target = $region3
    $region8: #{tpu_custom_call.1} parent=1 // loop_exit
      _
    %2458 = vsyncpa [#allocation5], 1
    %s2459 = scalar_lea.sflag [#allocation5], 1
    %2460 = vsyncpa %s2459, 1
    %2461 = vsyncpa [#allocation7], 1
    %2462 = vsyncpa [#allocation10], 1

</llo_original>
